<compile_context>
chip_gen: v7x
topology: tpu7x:2x2x1
jax: 0.10.0
libtpu: 0.0.40
codegen_flags: <defaults>
</compile_context>

<pallas_src>
import jax
import jax.numpy as jnp
import numpy as np
from jax import lax
from jax.experimental import pallas as pl
from jax.experimental.pallas import tpu as pltpu


# --------------------------- fused encoder kernel ---------------------------
def encoder_kernel(xb_ref, wih_ref, bih_ref, whh_ref, bhn_ref, wfc_ref, bfc_ref,
                   outf_ref, outb_ref, hid_ref):
    TB, H = outf_ref.shape
    Bp = hid_ref.shape[0]
    T = TB // Bp
    H2, H4, H6 = 2 * H, 4 * H, 6 * H

    # (1) Hoisted input projection, both directions & all gates: ONE matmul.
    #     column layout: (r_f | r_b | z_f | z_b | n_f | n_b), each H wide;
    #     row (t, b) already pairs x_t (fwd) with x_{T-1-t} (bwd).
    gi = (jnp.dot(xb_ref[...], wih_ref[...],
                  preferred_element_type=jnp.float32) + bih_ref[...])  # (T*Bp, 6H)

    whh = whh_ref[...]          # (2H, 6H) block-diagonal hidden weights
    bhn = bhn_ref[...]          # (1, 2H)  n-gate hidden bias (stays inside r*(.))

    h = jnp.zeros((Bp, H2), jnp.float32)     # carried state [hf | hb]
    hf_hist = [None] * T
    hb_hist = [None] * T

    # (2) Fused bidirectional recurrence; T small & static -> unrolled.
    for t in range(T):
        tb = T - 1 - t
        gi_t = gi[t * Bp:(t + 1) * Bp, :]    # full sublane-aligned (8, 6H) slice
        gh = jnp.dot(h, whh, preferred_element_type=jnp.float32)   # one MXU push
        rz = jax.nn.sigmoid(gi_t[:, 0:H4] + gh[:, 0:H4])           # 4H lanes
        r = rz[:, 0:H2]
        z = rz[:, H2:H4]
        n = jnp.tanh(gi_t[:, H4:H6] + r * (gh[:, H4:H6] + bhn))
        h = n + z * (h - n)                                        # (Bp, 2H)
        hf_hist[t] = h[:, 0:H]               # fwd output at time t
        hb_hist[tb] = h[:, H:H2]             # bwd output at time tb

    # (3) Bulk, sublane-aligned stores (no per-step masked partial stores).
    outf_ref[...] = jnp.concatenate(hf_hist, axis=0)   # (T*Bp, H)
    outb_ref[...] = jnp.concatenate(hb_hist, axis=0)   # (T*Bp, H)

    # (4) Fused fc + tanh tail; h already equals [hf_final | hb_final].
    hid_ref[...] = jnp.tanh(
        jnp.dot(h, wfc_ref[...], preferred_element_type=jnp.float32)
        + bfc_ref[...])


def _split3(w, H):
    return w[:, 0:H], w[:, H:2 * H], w[:, 2 * H:3 * H]


# ------------------------------ full forward --------------------------------
def encoder_bert_forward(src, params):
    T, B = src.shape
    E = params["emb_table"].shape[1]
    H = params["whh_f"].shape[0]
    D = params["w_fc"].shape[1]
    Bp = ((B + 7) // 8) * 8     # pad batch (sublane) dim up to a multiple of 8

    # TODO(synk): BERT embedding stack replaced by a plain lookup table;
    # dropout is the inference-time identity.
    embedded = params["emb_table"][src]                        # (T, B, E)
    emb_p = jnp.pad(embedded, ((0, 0), (0, Bp - B), (0, 0)))   # (T, Bp, E)
    # row (t, b) -> [x_t | x_{T-1-t}]: bakes the backward-direction time
    # reversal into the single hoisted input-projection matmul.
    x_big = jnp.concatenate([emb_p, emb_p[::-1]], axis=-1).reshape(T * Bp, 2 * E)

    # gate-column layout (r_f | r_b | z_f | z_b | n_f | n_b), each H wide
    zE = jnp.zeros((E, H), jnp.float32)
    zH = jnp.zeros((H, H), jnp.float32)
    rf, zf, nf = _split3(params["wih_f"], H)
    rb, zb, nb = _split3(params["wih_b"], H)
    wih_big = jnp.concatenate([
        jnp.concatenate([rf, zE, zf, zE, nf, zE], axis=1),
        jnp.concatenate([zE, rb, zE, zb, zE, nb], axis=1)], axis=0)     # (2E, 6H)

    rhf, zhf, nhf = _split3(params["whh_f"], H)
    rhb, zhb, nhb = _split3(params["whh_b"], H)
    whh_cat = jnp.concatenate([
        jnp.concatenate([rhf, zH, zhf, zH, nhf, zH], axis=1),
        jnp.concatenate([zH, rhb, zH, zhb, zH, nhb], axis=1)], axis=0)  # (2H, 6H)

    bir_f, biz_f, bin_f = _split3(params["bih_f"], H)
    bir_b, biz_b, bin_b = _split3(params["bih_b"], H)
    bhr_f, bhz_f, bhn_f = _split3(params["bhh_f"], H)
    bhr_b, bhz_b, bhn_b = _split3(params["bhh_b"], H)
    # fold the r/z hidden biases into the hoisted input bias; only the n-gate
    # hidden bias stays inside the recurrence (it is multiplied by r).
    bias_cat = jnp.concatenate([bir_f + bhr_f, bir_b + bhr_b,
                                biz_f + bhz_f, biz_b + bhz_b,
                                bin_f, bin_b], axis=1)                  # (1, 6H)
    bhh_n_cat = jnp.concatenate([bhn_f, bhn_b], axis=1)                 # (1, 2H)

    vmem = pl.BlockSpec(memory_space=pltpu.MemorySpace.VMEM)
    out_f, out_b, hidden_p = pl.pallas_call(
        encoder_kernel,
        out_shape=(jax.ShapeDtypeStruct((T * Bp, H), jnp.float32),
                   jax.ShapeDtypeStruct((T * Bp, H), jnp.float32),
                   jax.ShapeDtypeStruct((Bp, D), jnp.float32)),
        in_specs=[vmem] * 7,
        out_specs=(vmem, vmem, vmem),
    )(x_big, wih_big, bias_cat, whh_cat, bhh_n_cat,
      params["w_fc"], params["b_fc"])

    out_f = out_f.reshape(T, Bp, H)[:, :B, :]
    out_b = out_b.reshape(T, Bp, H)[:, :B, :]
    outputs = jnp.concatenate([out_f, out_b], axis=-1)    # (T, B, 2H)
    hidden = hidden_p[:B]                                 # (B, D)
    return outputs, hidden


# ------------------------------ JAX reference --------------------------------
def gru_ref(x, wih, bih, whh, bhh):
    B = x.shape[1]
    H = whh.shape[0]

    def step(h, xt):
        gi = xt @ wih + bih
        gh = h @ whh + bhh
        r = jax.nn.sigmoid(gi[:, :H] + gh[:, :H])
        z = jax.nn.sigmoid(gi[:, H:2 * H] + gh[:, H:2 * H])
        n = jnp.tanh(gi[:, 2 * H:] + r * gh[:, 2 * H:])
        hn = (1.0 - z) * n + z * h
        return hn, hn

    h0 = jnp.zeros((B, H), jnp.float32)
    hfin, outs = lax.scan(step, h0, x)
    return outs, hfin


def encoder_bert_ref(src, params):
    embedded = params["emb_table"][src]
    out_f, h_f = gru_ref(embedded, params["wih_f"], params["bih_f"],
                         params["whh_f"], params["bhh_f"])
    out_b_rev, h_b = gru_ref(embedded[::-1], params["wih_b"], params["bih_b"],
                             params["whh_b"], params["bhh_b"])
    out_b = out_b_rev[::-1]
    outputs = jnp.concatenate([out_f, out_b], axis=-1)
    hcat = jnp.concatenate([h_f, h_b], axis=-1)
    hidden = jnp.tanh(hcat @ params["w_fc"] + params["b_fc"])
    return outputs, hidden


# --------------------------------- params ------------------------------------
def init_params(key, input_dim, emb_dim, enc_hid_dim, dec_hid_dim):
    keys = jax.random.split(key, 12)
    H, E, D = enc_hid_dim, emb_dim, dec_hid_dim
    s = 1.0 / np.sqrt(H)

    def u(k, shape, scale):
        return jax.random.uniform(k, shape, jnp.float32, -scale, scale)

    return {
        "emb_table": u(keys[0], (input_dim, E), 0.1),
        # forward GRU, gate order (r|z|n) concatenated along the output dim
        "wih_f": u(keys[1], (E, 3 * H), s),
        "whh_f": u(keys[2], (H, 3 * H), s),
        "bih_f": u(keys[3], (1, 3 * H), s),
        "bhh_f": u(keys[4], (1, 3 * H), s),
        # backward GRU
        "wih_b": u(keys[5], (E, 3 * H), s),
        "whh_b": u(keys[6], (H, 3 * H), s),
        "bih_b": u(keys[7], (1, 3 * H), s),
        "bhh_b": u(keys[8], (1, 3 * H), s),
        # fc: Linear(2H -> D), stored transposed (2H, D)
        "w_fc": u(keys[9], (2 * H, D), 1.0 / np.sqrt(2 * H)),
        "b_fc": u(keys[10], (1, D), 1.0 / np.sqrt(2 * H)),
    }


if __name__ == "__main__":
    # small shapes: vocab=50, emb=32, enc_hid=32, dec_hid=32, seq=8, batch=2
    input_dim, emb_dim, enc_hid_dim, dec_hid_dim = 50, 32, 32, 32
    T, B = 8, 2

    key = jax.random.PRNGKey(0)
    pkey, skey = jax.random.split(key)
    params = init_params(pkey, input_dim, emb_dim, enc_hid_dim, dec_hid_dim)
    src = jax.random.randint(skey, (T, B), 0, input_dim, dtype=jnp.int32)

    fwd = jax.jit(encoder_bert_forward)
    outputs, hidden = fwd(src, params)
    jax.block_until_ready((outputs, hidden))

    outputs_ref, hidden_ref = encoder_bert_ref(src, params)
    np.testing.assert_allclose(np.asarray(outputs), np.asarray(outputs_ref),
                               rtol=1e-3, atol=1e-3)
    np.testing.assert_allclose(np.asarray(hidden), np.asarray(hidden_ref),
                               rtol=1e-3, atol=1e-3)

    assert outputs.shape == (T, B, 2 * enc_hid_dim)
    assert hidden.shape == (B, dec_hid_dim)
    print("KERNEL_OK")
</pallas_src>

<mosaic_0001>
module attributes {stable_mosaic.version = 11 : i64} {
  func.func @encoder_kernel(%arg0: memref<64x64xf32, #tpu.memory_space<vmem>>, %arg1: memref<64x192xf32, #tpu.memory_space<vmem>>, %arg2: memref<1x192xf32, #tpu.memory_space<vmem>>, %arg3: memref<64x192xf32, #tpu.memory_space<vmem>>, %arg4: memref<1x64xf32, #tpu.memory_space<vmem>>, %arg5: memref<64x32xf32, #tpu.memory_space<vmem>>, %arg6: memref<1x32xf32, #tpu.memory_space<vmem>>, %arg7: memref<64x32xf32, #tpu.memory_space<vmem>>, %arg8: memref<64x32xf32, #tpu.memory_space<vmem>>, %arg9: memref<8x32xf32, #tpu.memory_space<vmem>>) attributes {dimension_semantics = [], scalar_prefetch = 0 : i64, scratch_operands = 0 : i64, tpu.core_type = #tpu.core_type<tc>} {
    %c0 = arith.constant 0 : index
    %c0_0 = arith.constant 0 : index
    %0 = vector.load %arg0[%c0, %c0_0] : memref<64x64xf32, #tpu.memory_space<vmem>>, vector<64x64xf32>
    %c0_1 = arith.constant 0 : index
    %c0_2 = arith.constant 0 : index
    %1 = vector.load %arg1[%c0_1, %c0_2] : memref<64x192xf32, #tpu.memory_space<vmem>>, vector<64x192xf32>
    %cst = arith.constant dense<0.000000e+00> : vector<64x192xf32>
    %2 = tpu.matmul %0, %1, %cst {dimension_numbers = #tpu.dot_dimension_numbers<[1], [0], [0], [1], [0, 0, 1, 1], [], []>} : vector<64x64xf32>, vector<64x192xf32>, vector<64x192xf32> -> vector<64x192xf32>
    %c0_3 = arith.constant 0 : index
    %c0_4 = arith.constant 0 : index
    %3 = vector.load %arg2[%c0_3, %c0_4] : memref<1x192xf32, #tpu.memory_space<vmem>>, vector<1x192xf32>
    %4 = vector.broadcast %3 : vector<1x192xf32> to vector<64x192xf32>
    %5 = arith.addf %2, %4 : vector<64x192xf32>
    %c0_5 = arith.constant 0 : index
    %c0_6 = arith.constant 0 : index
    %6 = vector.load %arg3[%c0_5, %c0_6] : memref<64x192xf32, #tpu.memory_space<vmem>>, vector<64x192xf32>
    %c0_7 = arith.constant 0 : index
    %c0_8 = arith.constant 0 : index
    %7 = vector.load %arg4[%c0_7, %c0_8] : memref<1x64xf32, #tpu.memory_space<vmem>>, vector<1x64xf32>
    %cst_9 = arith.constant 0.000000e+00 : f32
    %8 = vector.broadcast %cst_9 : f32 to vector<8x64xf32>
    %9 = vector.extract_strided_slice %5 {offsets = [0, 0], sizes = [8, 192], strides = [1, 1]} : vector<64x192xf32> to vector<8x192xf32>
    %cst_10 = arith.constant dense<0.000000e+00> : vector<8x192xf32>
    %10 = tpu.matmul %8, %6, %cst_10 {dimension_numbers = #tpu.dot_dimension_numbers<[1], [0], [0], [1], [0, 0, 1, 1], [], []>} : vector<8x64xf32>, vector<64x192xf32>, vector<8x192xf32> -> vector<8x192xf32>
    %11 = vector.extract_strided_slice %9 {offsets = [0, 0], sizes = [8, 128], strides = [1, 1]} : vector<8x192xf32> to vector<8x128xf32>
    %12 = vector.extract_strided_slice %10 {offsets = [0, 0], sizes = [8, 128], strides = [1, 1]} : vector<8x192xf32> to vector<8x128xf32>
    %13 = arith.addf %11, %12 : vector<8x128xf32>
    %14 = arith.negf %13 : vector<8x128xf32>
    %15 = math.exp %14 : vector<8x128xf32>
    %cst_11 = arith.constant 1.000000e+00 : f32
    %16 = vector.broadcast %cst_11 : f32 to vector<8x128xf32>
    %17 = arith.addf %16, %15 : vector<8x128xf32>
    %18 = arith.divf %16, %17 : vector<8x128xf32>
    %19 = vector.extract_strided_slice %18 {offsets = [0, 0], sizes = [8, 64], strides = [1, 1]} : vector<8x128xf32> to vector<8x64xf32>
    %20 = vector.extract_strided_slice %18 {offsets = [0, 64], sizes = [8, 64], strides = [1, 1]} : vector<8x128xf32> to vector<8x64xf32>
    %21 = vector.extract_strided_slice %9 {offsets = [0, 128], sizes = [8, 64], strides = [1, 1]} : vector<8x192xf32> to vector<8x64xf32>
    %22 = vector.extract_strided_slice %10 {offsets = [0, 128], sizes = [8, 64], strides = [1, 1]} : vector<8x192xf32> to vector<8x64xf32>
    %23 = vector.broadcast %7 : vector<1x64xf32> to vector<8x64xf32>
    %24 = arith.addf %22, %23 : vector<8x64xf32>
    %25 = arith.mulf %19, %24 : vector<8x64xf32>
    %26 = arith.addf %21, %25 : vector<8x64xf32>
    %27 = math.tanh %26 : vector<8x64xf32>
    %28 = arith.subf %8, %27 : vector<8x64xf32>
    %29 = arith.mulf %20, %28 : vector<8x64xf32>
    %30 = arith.addf %27, %29 : vector<8x64xf32>
    %31 = vector.extract_strided_slice %30 {offsets = [0, 0], sizes = [8, 32], strides = [1, 1]} : vector<8x64xf32> to vector<8x32xf32>
    %32 = vector.extract_strided_slice %30 {offsets = [0, 32], sizes = [8, 32], strides = [1, 1]} : vector<8x64xf32> to vector<8x32xf32>
    %33 = vector.extract_strided_slice %5 {offsets = [8, 0], sizes = [8, 192], strides = [1, 1]} : vector<64x192xf32> to vector<8x192xf32>
    %cst_12 = arith.constant dense<0.000000e+00> : vector<8x192xf32>
    %34 = tpu.matmul %30, %6, %cst_12 {dimension_numbers = #tpu.dot_dimension_numbers<[1], [0], [0], [1], [0, 0, 1, 1], [], []>} : vector<8x64xf32>, vector<64x192xf32>, vector<8x192xf32> -> vector<8x192xf32>
    %35 = vector.extract_strided_slice %33 {offsets = [0, 0], sizes = [8, 128], strides = [1, 1]} : vector<8x192xf32> to vector<8x128xf32>
    %36 = vector.extract_strided_slice %34 {offsets = [0, 0], sizes = [8, 128], strides = [1, 1]} : vector<8x192xf32> to vector<8x128xf32>
    %37 = arith.addf %35, %36 : vector<8x128xf32>
    %38 = arith.negf %37 : vector<8x128xf32>
    %39 = math.exp %38 : vector<8x128xf32>
    %cst_13 = arith.constant 1.000000e+00 : f32
    %40 = vector.broadcast %cst_13 : f32 to vector<8x128xf32>
    %41 = arith.addf %40, %39 : vector<8x128xf32>
    %42 = arith.divf %40, %41 : vector<8x128xf32>
    %43 = vector.extract_strided_slice %42 {offsets = [0, 0], sizes = [8, 64], strides = [1, 1]} : vector<8x128xf32> to vector<8x64xf32>
    %44 = vector.extract_strided_slice %42 {offsets = [0, 64], sizes = [8, 64], strides = [1, 1]} : vector<8x128xf32> to vector<8x64xf32>
    %45 = vector.extract_strided_slice %33 {offsets = [0, 128], sizes = [8, 64], strides = [1, 1]} : vector<8x192xf32> to vector<8x64xf32>
    %46 = vector.extract_strided_slice %34 {offsets = [0, 128], sizes = [8, 64], strides = [1, 1]} : vector<8x192xf32> to vector<8x64xf32>
    %47 = vector.broadcast %7 : vector<1x64xf32> to vector<8x64xf32>
    %48 = arith.addf %46, %47 : vector<8x64xf32>
    %49 = arith.mulf %43, %48 : vector<8x64xf32>
    %50 = arith.addf %45, %49 : vector<8x64xf32>
    %51 = math.tanh %50 : vector<8x64xf32>
    %52 = arith.subf %30, %51 : vector<8x64xf32>
    %53 = arith.mulf %44, %52 : vector<8x64xf32>
    %54 = arith.addf %51, %53 : vector<8x64xf32>
    %55 = vector.extract_strided_slice %54 {offsets = [0, 0], sizes = [8, 32], strides = [1, 1]} : vector<8x64xf32> to vector<8x32xf32>
    %56 = vector.extract_strided_slice %54 {offsets = [0, 32], sizes = [8, 32], strides = [1, 1]} : vector<8x64xf32> to vector<8x32xf32>
    %57 = vector.extract_strided_slice %5 {offsets = [16, 0], sizes = [8, 192], strides = [1, 1]} : vector<64x192xf32> to vector<8x192xf32>
    %cst_14 = arith.constant dense<0.000000e+00> : vector<8x192xf32>
    %58 = tpu.matmul %54, %6, %cst_14 {dimension_numbers = #tpu.dot_dimension_numbers<[1], [0], [0], [1], [0, 0, 1, 1], [], []>} : vector<8x64xf32>, vector<64x192xf32>, vector<8x192xf32> -> vector<8x192xf32>
    %59 = vector.extract_strided_slice %57 {offsets = [0, 0], sizes = [8, 128], strides = [1, 1]} : vector<8x192xf32> to vector<8x128xf32>
    %60 = vector.extract_strided_slice %58 {offsets = [0, 0], sizes = [8, 128], strides = [1, 1]} : vector<8x192xf32> to vector<8x128xf32>
    %61 = arith.addf %59, %60 : vector<8x128xf32>
    %62 = arith.negf %61 : vector<8x128xf32>
    %63 = math.exp %62 : vector<8x128xf32>
    %cst_15 = arith.constant 1.000000e+00 : f32
    %64 = vector.broadcast %cst_15 : f32 to vector<8x128xf32>
    %65 = arith.addf %64, %63 : vector<8x128xf32>
    %66 = arith.divf %64, %65 : vector<8x128xf32>
    %67 = vector.extract_strided_slice %66 {offsets = [0, 0], sizes = [8, 64], strides = [1, 1]} : vector<8x128xf32> to vector<8x64xf32>
    %68 = vector.extract_strided_slice %66 {offsets = [0, 64], sizes = [8, 64], strides = [1, 1]} : vector<8x128xf32> to vector<8x64xf32>
    %69 = vector.extract_strided_slice %57 {offsets = [0, 128], sizes = [8, 64], strides = [1, 1]} : vector<8x192xf32> to vector<8x64xf32>
    %70 = vector.extract_strided_slice %58 {offsets = [0, 128], sizes = [8, 64], strides = [1, 1]} : vector<8x192xf32> to vector<8x64xf32>
    %71 = vector.broadcast %7 : vector<1x64xf32> to vector<8x64xf32>
    %72 = arith.addf %70, %71 : vector<8x64xf32>
    %73 = arith.mulf %67, %72 : vector<8x64xf32>
    %74 = arith.addf %69, %73 : vector<8x64xf32>
    %75 = math.tanh %74 : vector<8x64xf32>
    %76 = arith.subf %54, %75 : vector<8x64xf32>
    %77 = arith.mulf %68, %76 : vector<8x64xf32>
    %78 = arith.addf %75, %77 : vector<8x64xf32>
    %79 = vector.extract_strided_slice %78 {offsets = [0, 0], sizes = [8, 32], strides = [1, 1]} : vector<8x64xf32> to vector<8x32xf32>
    %80 = vector.extract_strided_slice %78 {offsets = [0, 32], sizes = [8, 32], strides = [1, 1]} : vector<8x64xf32> to vector<8x32xf32>
    %81 = vector.extract_strided_slice %5 {offsets = [24, 0], sizes = [8, 192], strides = [1, 1]} : vector<64x192xf32> to vector<8x192xf32>
    %cst_16 = arith.constant dense<0.000000e+00> : vector<8x192xf32>
    %82 = tpu.matmul %78, %6, %cst_16 {dimension_numbers = #tpu.dot_dimension_numbers<[1], [0], [0], [1], [0, 0, 1, 1], [], []>} : vector<8x64xf32>, vector<64x192xf32>, vector<8x192xf32> -> vector<8x192xf32>
    %83 = vector.extract_strided_slice %81 {offsets = [0, 0], sizes = [8, 128], strides = [1, 1]} : vector<8x192xf32> to vector<8x128xf32>
    %84 = vector.extract_strided_slice %82 {offsets = [0, 0], sizes = [8, 128], strides = [1, 1]} : vector<8x192xf32> to vector<8x128xf32>
    %85 = arith.addf %83, %84 : vector<8x128xf32>
    %86 = arith.negf %85 : vector<8x128xf32>
    %87 = math.exp %86 : vector<8x128xf32>
    %cst_17 = arith.constant 1.000000e+00 : f32
    %88 = vector.broadcast %cst_17 : f32 to vector<8x128xf32>
    %89 = arith.addf %88, %87 : vector<8x128xf32>
    %90 = arith.divf %88, %89 : vector<8x128xf32>
    %91 = vector.extract_strided_slice %90 {offsets = [0, 0], sizes = [8, 64], strides = [1, 1]} : vector<8x128xf32> to vector<8x64xf32>
    %92 = vector.extract_strided_slice %90 {offsets = [0, 64], sizes = [8, 64], strides = [1, 1]} : vector<8x128xf32> to vector<8x64xf32>
    %93 = vector.extract_strided_slice %81 {offsets = [0, 128], sizes = [8, 64], strides = [1, 1]} : vector<8x192xf32> to vector<8x64xf32>
    %94 = vector.extract_strided_slice %82 {offsets = [0, 128], sizes = [8, 64], strides = [1, 1]} : vector<8x192xf32> to vector<8x64xf32>
    %95 = vector.broadcast %7 : vector<1x64xf32> to vector<8x64xf32>
    %96 = arith.addf %94, %95 : vector<8x64xf32>
    %97 = arith.mulf %91, %96 : vector<8x64xf32>
    %98 = arith.addf %93, %97 : vector<8x64xf32>
    %99 = math.tanh %98 : vector<8x64xf32>
    %100 = arith.subf %78, %99 : vector<8x64xf32>
    %101 = arith.mulf %92, %100 : vector<8x64xf32>
    %102 = arith.addf %99, %101 : vector<8x64xf32>
    %103 = vector.extract_strided_slice %102 {offsets = [0, 0], sizes = [8, 32], strides = [1, 1]} : vector<8x64xf32> to vector<8x32xf32>
    %104 = vector.extract_strided_slice %102 {offsets = [0, 32], sizes = [8, 32], strides = [1, 1]} : vector<8x64xf32> to vector<8x32xf32>
    %105 = vector.extract_strided_slice %5 {offsets = [32, 0], sizes = [8, 192], strides = [1, 1]} : vector<64x192xf32> to vector<8x192xf32>
    %cst_18 = arith.constant dense<0.000000e+00> : vector<8x192xf32>
    %106 = tpu.matmul %102, %6, %cst_18 {dimension_numbers = #tpu.dot_dimension_numbers<[1], [0], [0], [1], [0, 0, 1, 1], [], []>} : vector<8x64xf32>, vector<64x192xf32>, vector<8x192xf32> -> vector<8x192xf32>
    %107 = vector.extract_strided_slice %105 {offsets = [0, 0], sizes = [8, 128], strides = [1, 1]} : vector<8x192xf32> to vector<8x128xf32>
    %108 = vector.extract_strided_slice %106 {offsets = [0, 0], sizes = [8, 128], strides = [1, 1]} : vector<8x192xf32> to vector<8x128xf32>
    %109 = arith.addf %107, %108 : vector<8x128xf32>
    %110 = arith.negf %109 : vector<8x128xf32>
    %111 = math.exp %110 : vector<8x128xf32>
    %cst_19 = arith.constant 1.000000e+00 : f32
    %112 = vector.broadcast %cst_19 : f32 to vector<8x128xf32>
    %113 = arith.addf %112, %111 : vector<8x128xf32>
    %114 = arith.divf %112, %113 : vector<8x128xf32>
    %115 = vector.extract_strided_slice %114 {offsets = [0, 0], sizes = [8, 64], strides = [1, 1]} : vector<8x128xf32> to vector<8x64xf32>
    %116 = vector.extract_strided_slice %114 {offsets = [0, 64], sizes = [8, 64], strides = [1, 1]} : vector<8x128xf32> to vector<8x64xf32>
    %117 = vector.extract_strided_slice %105 {offsets = [0, 128], sizes = [8, 64], strides = [1, 1]} : vector<8x192xf32> to vector<8x64xf32>
    %118 = vector.extract_strided_slice %106 {offsets = [0, 128], sizes = [8, 64], strides = [1, 1]} : vector<8x192xf32> to vector<8x64xf32>
    %119 = vector.broadcast %7 : vector<1x64xf32> to vector<8x64xf32>
    %120 = arith.addf %118, %119 : vector<8x64xf32>
    %121 = arith.mulf %115, %120 : vector<8x64xf32>
    %122 = arith.addf %117, %121 : vector<8x64xf32>
    %123 = math.tanh %122 : vector<8x64xf32>
    %124 = arith.subf %102, %123 : vector<8x64xf32>
    %125 = arith.mulf %116, %124 : vector<8x64xf32>
    %126 = arith.addf %123, %125 : vector<8x64xf32>
    %127 = vector.extract_strided_slice %126 {offsets = [0, 0], sizes = [8, 32], strides = [1, 1]} : vector<8x64xf32> to vector<8x32xf32>
    %128 = vector.extract_strided_slice %126 {offsets = [0, 32], sizes = [8, 32], strides = [1, 1]} : vector<8x64xf32> to vector<8x32xf32>
    %129 = vector.extract_strided_slice %5 {offsets = [40, 0], sizes = [8, 192], strides = [1, 1]} : vector<64x192xf32> to vector<8x192xf32>
    %cst_20 = arith.constant dense<0.000000e+00> : vector<8x192xf32>
    %130 = tpu.matmul %126, %6, %cst_20 {dimension_numbers = #tpu.dot_dimension_numbers<[1], [0], [0], [1], [0, 0, 1, 1], [], []>} : vector<8x64xf32>, vector<64x192xf32>, vector<8x192xf32> -> vector<8x192xf32>
    %131 = vector.extract_strided_slice %129 {offsets = [0, 0], sizes = [8, 128], strides = [1, 1]} : vector<8x192xf32> to vector<8x128xf32>
    %132 = vector.extract_strided_slice %130 {offsets = [0, 0], sizes = [8, 128], strides = [1, 1]} : vector<8x192xf32> to vector<8x128xf32>
    %133 = arith.addf %131, %132 : vector<8x128xf32>
    %134 = arith.negf %133 : vector<8x128xf32>
    %135 = math.exp %134 : vector<8x128xf32>
    %cst_21 = arith.constant 1.000000e+00 : f32
    %136 = vector.broadcast %cst_21 : f32 to vector<8x128xf32>
    %137 = arith.addf %136, %135 : vector<8x128xf32>
    %138 = arith.divf %136, %137 : vector<8x128xf32>
    %139 = vector.extract_strided_slice %138 {offsets = [0, 0], sizes = [8, 64], strides = [1, 1]} : vector<8x128xf32> to vector<8x64xf32>
    %140 = vector.extract_strided_slice %138 {offsets = [0, 64], sizes = [8, 64], strides = [1, 1]} : vector<8x128xf32> to vector<8x64xf32>
    %141 = vector.extract_strided_slice %129 {offsets = [0, 128], sizes = [8, 64], strides = [1, 1]} : vector<8x192xf32> to vector<8x64xf32>
    %142 = vector.extract_strided_slice %130 {offsets = [0, 128], sizes = [8, 64], strides = [1, 1]} : vector<8x192xf32> to vector<8x64xf32>
    %143 = vector.broadcast %7 : vector<1x64xf32> to vector<8x64xf32>
    %144 = arith.addf %142, %143 : vector<8x64xf32>
    %145 = arith.mulf %139, %144 : vector<8x64xf32>
    %146 = arith.addf %141, %145 : vector<8x64xf32>
    %147 = math.tanh %146 : vector<8x64xf32>
    %148 = arith.subf %126, %147 : vector<8x64xf32>
    %149 = arith.mulf %140, %148 : vector<8x64xf32>
    %150 = arith.addf %147, %149 : vector<8x64xf32>
    %151 = vector.extract_strided_slice %150 {offsets = [0, 0], sizes = [8, 32], strides = [1, 1]} : vector<8x64xf32> to vector<8x32xf32>
    %152 = vector.extract_strided_slice %150 {offsets = [0, 32], sizes = [8, 32], strides = [1, 1]} : vector<8x64xf32> to vector<8x32xf32>
    %153 = vector.extract_strided_slice %5 {offsets = [48, 0], sizes = [8, 192], strides = [1, 1]} : vector<64x192xf32> to vector<8x192xf32>
    %cst_22 = arith.constant dense<0.000000e+00> : vector<8x192xf32>
    %154 = tpu.matmul %150, %6, %cst_22 {dimension_numbers = #tpu.dot_dimension_numbers<[1], [0], [0], [1], [0, 0, 1, 1], [], []>} : vector<8x64xf32>, vector<64x192xf32>, vector<8x192xf32> -> vector<8x192xf32>
    %155 = vector.extract_strided_slice %153 {offsets = [0, 0], sizes = [8, 128], strides = [1, 1]} : vector<8x192xf32> to vector<8x128xf32>
    %156 = vector.extract_strided_slice %154 {offsets = [0, 0], sizes = [8, 128], strides = [1, 1]} : vector<8x192xf32> to vector<8x128xf32>
    %157 = arith.addf %155, %156 : vector<8x128xf32>
    %158 = arith.negf %157 : vector<8x128xf32>
    %159 = math.exp %158 : vector<8x128xf32>
    %cst_23 = arith.constant 1.000000e+00 : f32
    %160 = vector.broadcast %cst_23 : f32 to vector<8x128xf32>
    %161 = arith.addf %160, %159 : vector<8x128xf32>
    %162 = arith.divf %160, %161 : vector<8x128xf32>
    %163 = vector.extract_strided_slice %162 {offsets = [0, 0], sizes = [8, 64], strides = [1, 1]} : vector<8x128xf32> to vector<8x64xf32>
    %164 = vector.extract_strided_slice %162 {offsets = [0, 64], sizes = [8, 64], strides = [1, 1]} : vector<8x128xf32> to vector<8x64xf32>
    %165 = vector.extract_strided_slice %153 {offsets = [0, 128], sizes = [8, 64], strides = [1, 1]} : vector<8x192xf32> to vector<8x64xf32>
    %166 = vector.extract_strided_slice %154 {offsets = [0, 128], sizes = [8, 64], strides = [1, 1]} : vector<8x192xf32> to vector<8x64xf32>
    %167 = vector.broadcast %7 : vector<1x64xf32> to vector<8x64xf32>
    %168 = arith.addf %166, %167 : vector<8x64xf32>
    %169 = arith.mulf %163, %168 : vector<8x64xf32>
    %170 = arith.addf %165, %169 : vector<8x64xf32>
    %171 = math.tanh %170 : vector<8x64xf32>
    %172 = arith.subf %150, %171 : vector<8x64xf32>
    %173 = arith.mulf %164, %172 : vector<8x64xf32>
    %174 = arith.addf %171, %173 : vector<8x64xf32>
    %175 = vector.extract_strided_slice %174 {offsets = [0, 0], sizes = [8, 32], strides = [1, 1]} : vector<8x64xf32> to vector<8x32xf32>
    %176 = vector.extract_strided_slice %174 {offsets = [0, 32], sizes = [8, 32], strides = [1, 1]} : vector<8x64xf32> to vector<8x32xf32>
    %177 = vector.extract_strided_slice %5 {offsets = [56, 0], sizes = [8, 192], strides = [1, 1]} : vector<64x192xf32> to vector<8x192xf32>
    %cst_24 = arith.constant dense<0.000000e+00> : vector<8x192xf32>
    %178 = tpu.matmul %174, %6, %cst_24 {dimension_numbers = #tpu.dot_dimension_numbers<[1], [0], [0], [1], [0, 0, 1, 1], [], []>} : vector<8x64xf32>, vector<64x192xf32>, vector<8x192xf32> -> vector<8x192xf32>
    %179 = vector.extract_strided_slice %177 {offsets = [0, 0], sizes = [8, 128], strides = [1, 1]} : vector<8x192xf32> to vector<8x128xf32>
    %180 = vector.extract_strided_slice %178 {offsets = [0, 0], sizes = [8, 128], strides = [1, 1]} : vector<8x192xf32> to vector<8x128xf32>
    %181 = arith.addf %179, %180 : vector<8x128xf32>
    %182 = arith.negf %181 : vector<8x128xf32>
    %183 = math.exp %182 : vector<8x128xf32>
    %cst_25 = arith.constant 1.000000e+00 : f32
    %184 = vector.broadcast %cst_25 : f32 to vector<8x128xf32>
    %185 = arith.addf %184, %183 : vector<8x128xf32>
    %186 = arith.divf %184, %185 : vector<8x128xf32>
    %187 = vector.extract_strided_slice %186 {offsets = [0, 0], sizes = [8, 64], strides = [1, 1]} : vector<8x128xf32> to vector<8x64xf32>
    %188 = vector.extract_strided_slice %186 {offsets = [0, 64], sizes = [8, 64], strides = [1, 1]} : vector<8x128xf32> to vector<8x64xf32>
    %189 = vector.extract_strided_slice %177 {offsets = [0, 128], sizes = [8, 64], strides = [1, 1]} : vector<8x192xf32> to vector<8x64xf32>
    %190 = vector.extract_strided_slice %178 {offsets = [0, 128], sizes = [8, 64], strides = [1, 1]} : vector<8x192xf32> to vector<8x64xf32>
    %191 = vector.broadcast %7 : vector<1x64xf32> to vector<8x64xf32>
    %192 = arith.addf %190, %191 : vector<8x64xf32>
    %193 = arith.mulf %187, %192 : vector<8x64xf32>
    %194 = arith.addf %189, %193 : vector<8x64xf32>
    %195 = math.tanh %194 : vector<8x64xf32>
    %196 = arith.subf %174, %195 : vector<8x64xf32>
    %197 = arith.mulf %188, %196 : vector<8x64xf32>
    %198 = arith.addf %195, %197 : vector<8x64xf32>
    %199 = vector.extract_strided_slice %198 {offsets = [0, 0], sizes = [8, 32], strides = [1, 1]} : vector<8x64xf32> to vector<8x32xf32>
    %200 = vector.extract_strided_slice %198 {offsets = [0, 32], sizes = [8, 32], strides = [1, 1]} : vector<8x64xf32> to vector<8x32xf32>
    %201 = tpu.concatenate %31, %55, %79, %103, %127, %151, %175, %199 in 0 : vector<8x32xf32>, vector<8x32xf32>, vector<8x32xf32>, vector<8x32xf32>, vector<8x32xf32>, vector<8x32xf32>, vector<8x32xf32>, vector<8x32xf32> -> vector<64x32xf32>
    %c0_26 = arith.constant 0 : index
    %c0_27 = arith.constant 0 : index
    %202 = vector.load %arg7[%c0_26, %c0_27] : memref<64x32xf32, #tpu.memory_space<vmem>>, vector<64x32xf32>
    tpu.vector_store %arg7[%c0_26, %c0_27], %201 {strides = array<i32>} : memref<64x32xf32, #tpu.memory_space<vmem>>, vector<64x32xf32>,
    %203 = tpu.concatenate %200, %176, %152, %128, %104, %80, %56, %32 in 0 : vector<8x32xf32>, vector<8x32xf32>, vector<8x32xf32>, vector<8x32xf32>, vector<8x32xf32>, vector<8x32xf32>, vector<8x32xf32>, vector<8x32xf32> -> vector<64x32xf32>
    %c0_28 = arith.constant 0 : index
    %c0_29 = arith.constant 0 : index
    %204 = vector.load %arg8[%c0_28, %c0_29] : memref<64x32xf32, #tpu.memory_space<vmem>>, vector<64x32xf32>
    tpu.vector_store %arg8[%c0_28, %c0_29], %203 {strides = array<i32>} : memref<64x32xf32, #tpu.memory_space<vmem>>, vector<64x32xf32>,
    %c0_30 = arith.constant 0 : index
    %c0_31 = arith.constant 0 : index
    %205 = vector.load %arg5[%c0_30, %c0_31] : memref<64x32xf32, #tpu.memory_space<vmem>>, vector<64x32xf32>
    %cst_32 = arith.constant dense<0.000000e+00> : vector<8x32xf32>
    %206 = tpu.matmul %198, %205, %cst_32 {dimension_numbers = #tpu.dot_dimension_numbers<[1], [0], [0], [1], [0, 0, 1, 1], [], []>} : vector<8x64xf32>, vector<64x32xf32>, vector<8x32xf32> -> vector<8x32xf32>
    %c0_33 = arith.constant 0 : index
    %c0_34 = arith.constant 0 : index
    %207 = vector.load %arg6[%c0_33, %c0_34] : memref<1x32xf32, #tpu.memory_space<vmem>>, vector<1x32xf32>
    %208 = vector.broadcast %207 : vector<1x32xf32> to vector<8x32xf32>
    %209 = arith.addf %206, %208 : vector<8x32xf32>
    %210 = math.tanh %209 : vector<8x32xf32>
    %c0_35 = arith.constant 0 : index
    %c0_36 = arith.constant 0 : index
    %211 = vector.load %arg9[%c0_35, %c0_36] : memref<8x32xf32, #tpu.memory_space<vmem>>, vector<8x32xf32>
    tpu.vector_store %arg9[%c0_35, %c0_36], %210 {strides = array<i32>} : memref<8x32xf32, #tpu.memory_space<vmem>>, vector<8x32xf32>,
    return
  }
}

</mosaic_0001>

<llo_original>
// kernel: encoder_bert_forward.1
$region0: #{encoder_bert_forward.1}
  #allocation0 [shape = 'u32[]', space=smem, size = 0x4, offset = 0x4, fixed_abs, tag = 'smem constant byte address 0x4 - core index']
  #allocation1 [shape = 'u32[144,128]{1,0:T(1,128)}', space=vmem, size = 0x12000, scoped, tag = 'internal scratch']
  %s0 = inlined_call_operand.vmem [shape: f32[64,64], index: 0, kind: input, shape index: {}]
  %s1 = inlined_call_operand.vmem [shape: f32[64,192], index: 1, kind: input, shape index: {}]
  %s2 = inlined_call_operand.vmem [shape: f32[1,192], index: 2, kind: input, shape index: {}]
  %s3 = inlined_call_operand.vmem [shape: f32[64,192], index: 3, kind: input, shape index: {}]
  %s4 = inlined_call_operand.vmem [shape: f32[1,64], index: 4, kind: input, shape index: {}]
  %s5 = inlined_call_operand.vmem [shape: f32[64,32], index: 5, kind: input, shape index: {}]
  %s6 = inlined_call_operand.vmem [shape: f32[1,32], index: 6, kind: input, shape index: {}]
  %s7 = inlined_call_operand.vmem [shape: f32[64,32], index: 7, kind: output, shape index: {0}]
  %s8 = inlined_call_operand.vmem [shape: f32[64,32], index: 8, kind: output, shape index: {1}]
  %s9 = inlined_call_operand.vmem [shape: f32[8,32], index: 9, kind: output, shape index: {2}]
  %10 = xla_tuple %s7, %s8, %s9
  %s11 = sld [smem:[#allocation0]]
  $region54: #{encoder_bert_forward.1} parent=0
    _
  %s13 = ssub.s32 1, %s11
  %s14 = scalar_select 0, %s13, %s11
  // Predicated region
  $region2: #{encoder_bert_forward.1} parent=0 // pred_check
    _
  $region3: #{encoder_bert_forward.1} parent=0 // pred_check_branch
    %16 = sbr.rel (0) target = $region5
  $region4: #{encoder_bert_forward.1} parent=0 // pred_region
    _
  $region5: #{encoder_bert_forward.1} parent=0 // pred_fallthru
    _
  // Predicated region
  $region6: #{encoder_bert_forward.1} parent=0 // pred_check
    _
  $region7: #{encoder_bert_forward.1} parent=0 // pred_check_branch
    %18 = sbr.rel (0) target = $region9
  $region8: #{encoder_bert_forward.1} parent=0 // pred_region
    _
  $region9: #{encoder_bert_forward.1} parent=0 // pred_fallthru
    _
  // Predicated region
  $region10: #{encoder_bert_forward.1} parent=0 // pred_check
    _
  $region11: #{encoder_bert_forward.1} parent=0 // pred_check_branch
    %20 = sbr.rel (0) target = $region13
  $region12: #{encoder_bert_forward.1} parent=0 // pred_region
    _
  $region13: #{encoder_bert_forward.1} parent=0 // pred_fallthru
    _
  // Predicated region
  $region14: #{encoder_bert_forward.1} parent=0 // pred_check
    _
  $region15: #{encoder_bert_forward.1} parent=0 // pred_check_branch
    %22 = sbr.rel (0) target = $region17
  $region16: #{encoder_bert_forward.1} parent=0 // pred_region
    _
  $region17: #{encoder_bert_forward.1} parent=0 // pred_fallthru
    _
  // Predicated region
  $region18: #{encoder_bert_forward.1} parent=0 // pred_check
    _
  $region19: #{encoder_bert_forward.1} parent=0 // pred_check_branch
    %24 = sbr.rel (0) target = $region21
  $region20: #{encoder_bert_forward.1} parent=0 // pred_region
    _
  $region21: #{encoder_bert_forward.1} parent=0 // pred_fallthru
    _
  // Predicated region
  $region22: #{encoder_bert_forward.1} parent=0 // pred_check
    _
  $region23: #{encoder_bert_forward.1} parent=0 // pred_check_branch
    %26 = sbr.rel (0) target = $region25
  $region24: #{encoder_bert_forward.1} parent=0 // pred_region
    _
  $region25: #{encoder_bert_forward.1} parent=0 // pred_fallthru
    _
  // Predicated region
  $region26: #{encoder_bert_forward.1} parent=0 // pred_check
    _
  $region27: #{encoder_bert_forward.1} parent=0 // pred_check_branch
    %28 = sbr.rel (0) target = $region29
  $region28: #{encoder_bert_forward.1} parent=0 // pred_region
    _
  $region29: #{encoder_bert_forward.1} parent=0 // pred_fallthru
    _
  %v29 = vld [vmem:[%s0] sm:$0xff]
  %v30 = vld [vmem:[%s0 + $0x8] sm:$0xff]
  %v31 = vld [vmem:[%s0 + $0x10] sm:$0xff]
  %v32 = vld [vmem:[%s0 + $0x18] sm:$0xff]
  %v33 = vld [vmem:[%s0 + $0x20] sm:$0xff]
  %v34 = vld [vmem:[%s0 + $0x28] sm:$0xff]
  %v35 = vld [vmem:[%s0 + $0x30] sm:$0xff]
  %v36 = vld [vmem:[%s0 + $0x38] sm:$0xff]
  %v37 = vld [vmem:[%s1] sm:$0xff]
  %v38 = vld [vmem:[%s1 + $0x8] sm:$0xff]
  %v39 = vld [vmem:[%s1 + $0x10] sm:$0xff]
  %v40 = vld [vmem:[%s1 + $0x18] sm:$0xff]
  %v41 = vld [vmem:[%s1 + $0x20] sm:$0xff]
  %v42 = vld [vmem:[%s1 + $0x28] sm:$0xff]
  %v43 = vld [vmem:[%s1 + $0x30] sm:$0xff]
  %v44 = vld [vmem:[%s1 + $0x38] sm:$0xff]
  %v45 = vld [vmem:[%s1 + $0x40] sm:$0xff]
  %v46 = vld [vmem:[%s1 + $0x48] sm:$0xff]
  %v47 = vld [vmem:[%s1 + $0x50] sm:$0xff]
  %v48 = vld [vmem:[%s1 + $0x58] sm:$0xff]
  %v49 = vld [vmem:[%s1 + $0x60] sm:$0xff]
  %v50 = vld [vmem:[%s1 + $0x68] sm:$0xff]
  %v51 = vld [vmem:[%s1 + $0x70] sm:$0xff]
  %v52 = vld [vmem:[%s1 + $0x78] sm:$0xff]
  %v53 = vld [vmem:[%s2] sm:$0x3]
  %v55 = vlaneseq
  %v56 = vshrl.u32 %v55, 7
  %v57 = vsub.s32 0, %v56
  %v58 = vrot.slane %v53, %v57
  %v59 = vlaneseq
  %v60 = vshrl.u32 %v59, 7
  %v61 = vsub.s32 1, %v60
  %v62 = vrot.slane %v53, %v61
  %vm65 = vcmask 523264
  %v67 = vsel %vm65, %v29, 0
  %v70 = vsel %vm65, %v30, 0
  %v73 = vsel %vm65, %v31, 0
  %v76 = vsel %vm65, %v32, 0
  %v79 = vsel %vm65, %v33, 0
  %v82 = vsel %vm65, %v34, 0
  %v85 = vsel %vm65, %v35, 0
  %v88 = vsel %vm65, %v36, 0
  %90 = vmatprep.subr.mxu0 %v38
  %91 = vmatpush1.msra.mxu0 %v37
  %92 = vmatprep.subr.mxu0 %v40
  %93 = vmatpush1.msra.mxu0 %v39
  %94 = vmatprep.subr.mxu0 %v42
  %95 = vmatpush1.msra.mxu0 %v41
  %96 = vmatprep.subr.mxu0 %v44
  %97 = vmatpush1.msra.mxu0 %v43
  %98 = vmatprep.subr.mxu0 %v46
  %99 = vmatpush1.msra.mxu0 %v45
  %100 = vmatprep.subr.mxu0 %v48
  %101 = vmatpush1.msra.mxu0 %v47
  %102 = vmatprep.subr.mxu0 %v50
  %103 = vmatpush1.msra.mxu0 %v49
  %104 = vmatprep.subr.mxu0 %v52
  %105 = vmatpush1.msra.mxu0 %v51
  %106 = vmatprep.subr.mxu0 0.0
  %107 = vmatpush1.msra.mxu0 0.0
  %108 = vmatprep.subr.mxu0 0.0
  %109 = vmatpush1.msra.mxu0 0.0
  %110 = vmatprep.subr.mxu0 0.0
  %111 = vmatpush1.msra.mxu0 0.0
  %112 = vmatprep.subr.mxu0 0.0
  %113 = vmatpush1.msra.mxu0 0.0
  %114 = vmatprep.subr.mxu0 0.0
  %115 = vmatpush1.msra.mxu0 0.0
  %116 = vmatprep.subr.mxu0 0.0
  %117 = vmatpush1.msra.mxu0 0.0
  %118 = vmatprep.subr.mxu0 0.0
  %119 = vmatpush1.msra.mxu0 0.0
  %120 = vmatprep.subr.mxu0 0.0
  %121 = vmatpush1.msra.mxu0 0.0
  %122 = vmatprep.subr.mxu0 0.0
  %123 = vmatpush1.msra.mxu0 0.0
  %124 = vmatprep.subr.mxu0 0.0
  %125 = vmatpush1.msra.mxu0 0.0
  %126 = vmatprep.subr.mxu0 0.0
  %127 = vmatpush1.msra.mxu0 0.0
  %128 = vmatprep.subr.mxu0 0.0
  %129 = vmatpush1.msra.mxu0 0.0
  %130 = vmatprep.subr.mxu0 0.0
  %131 = vmatpush1.msra.mxu0 0.0
  %132 = vmatprep.subr.mxu0 0.0
  %133 = vmatpush1.msra.mxu0 0.0
  %134 = vmatprep.subr.mxu0 0.0
  %135 = vmatpush1.msra.mxu0 0.0
  %136 = vmatprep.subr.mxu0 0.0
  %137 = vmatpush1.msra.mxu0 0.0
  %138 = vmatprep.subr.mxu0 0.0
  %139 = vmatpush1.msra.mxu0 0.0
  %140 = vmatprep.subr.mxu0 0.0
  %141 = vmatpush1.msra.mxu0 0.0
  %142 = vmatprep.subr.mxu0 0.0
  %143 = vmatpush1.msra.mxu0 0.0
  %144 = vmatprep.subr.mxu0 0.0
  %145 = vmatpush1.msra.mxu0 0.0
  %146 = vmatprep.subr.mxu0 0.0
  %147 = vmatpush1.msra.mxu0 0.0
  %148 = vmatprep.subr.mxu0 0.0
  %149 = vmatpush1.msra.mxu0 0.0
  %150 = vmatprep.subr.mxu0 0.0
  %151 = vmatpush1.msra.mxu0 0.0
  %152 = vmatprep.subr.mxu0 0.0
  %153 = vmatpush1.msra.mxu0 0.0
  %154 = vmatprep.mubr.f32.mxu0 0.0
  %155 = vmatmul.mubr.f32.gmra.mrb[0].mxu0 %v67
  %v156 = vpop.f32.mrb[0].mxu0
  %v157 = vadd.f32 %v58, %v156
  %v158 = vpop.f32.mrb[0].mxu0
  %v159 = vadd.f32 %v62, %v158
  %160 = vmatprep.mubr.f32.mxu0 0.0
  %161 = vmatmul.mubr.f32.gmra.mrb[0].mxu0 %v70
  %v162 = vpop.f32.mrb[0].mxu0
  %v163 = vadd.f32 %v58, %v162
  %v164 = vpop.f32.mrb[0].mxu0
  %v165 = vadd.f32 %v62, %v164
  %166 = vmatprep.mubr.f32.mxu0 0.0
  %167 = vmatmul.mubr.f32.gmra.mrb[0].mxu0 %v73
  %v168 = vpop.f32.mrb[0].mxu0
  %v169 = vadd.f32 %v58, %v168
  %v170 = vpop.f32.mrb[0].mxu0
  %v171 = vadd.f32 %v62, %v170
  %172 = vmatprep.mubr.f32.mxu0 0.0
  %173 = vmatmul.mubr.f32.gmra.mrb[0].mxu0 %v76
  %v174 = vpop.f32.mrb[0].mxu0
  %v175 = vadd.f32 %v58, %v174
  %v176 = vpop.f32.mrb[0].mxu0
  %v177 = vadd.f32 %v62, %v176
  %178 = vmatprep.mubr.f32.mxu0 0.0
  %179 = vmatmul.mubr.f32.gmra.mrb[0].mxu0 %v79
  %v180 = vpop.f32.mrb[0].mxu0
  %v181 = vadd.f32 %v58, %v180
  %v182 = vpop.f32.mrb[0].mxu0
  %v183 = vadd.f32 %v62, %v182
  %184 = vmatprep.mubr.f32.mxu0 0.0
  %185 = vmatmul.mubr.f32.gmra.mrb[0].mxu0 %v82
  %v186 = vpop.f32.mrb[0].mxu0
  %v187 = vadd.f32 %v58, %v186
  %v188 = vpop.f32.mrb[0].mxu0
  %v189 = vadd.f32 %v62, %v188
  %190 = vmatprep.mubr.f32.mxu0 0.0
  %191 = vmatmul.mubr.f32.gmra.mrb[0].mxu0 %v85
  %v192 = vpop.f32.mrb[0].mxu0
  %v193 = vadd.f32 %v58, %v192
  %v194 = vpop.f32.mrb[0].mxu0
  %v195 = vadd.f32 %v62, %v194
  %196 = vmatprep.mubr.f32.mxu0 0.0
  %197 = vmatmul.mubr.f32.gmra.mrb[0].mxu0 %v88
  %v198 = vpop.f32.mrb[0].mxu0
  %v199 = vadd.f32 %v58, %v198
  %v200 = vpop.f32.mrb[0].mxu0
  %v201 = vadd.f32 %v62, %v200
  %202 = vdwg.mxu0
  %v203 = vld [vmem:[%s3] sm:$0xff]
  %v204 = vld [vmem:[%s3 + $0x8] sm:$0xff]
  %v205 = vld [vmem:[%s3 + $0x10] sm:$0xff]
  %v206 = vld [vmem:[%s3 + $0x18] sm:$0xff]
  %v207 = vld [vmem:[%s3 + $0x20] sm:$0xff]
  %v208 = vld [vmem:[%s3 + $0x28] sm:$0xff]
  %v209 = vld [vmem:[%s3 + $0x30] sm:$0xff]
  %v210 = vld [vmem:[%s3 + $0x38] sm:$0xff]
  %v211 = vld [vmem:[%s3 + $0x40] sm:$0xff]
  %v212 = vld [vmem:[%s3 + $0x48] sm:$0xff]
  %v213 = vld [vmem:[%s3 + $0x50] sm:$0xff]
  %v214 = vld [vmem:[%s3 + $0x58] sm:$0xff]
  %v215 = vld [vmem:[%s3 + $0x60] sm:$0xff]
  %v216 = vld [vmem:[%s3 + $0x68] sm:$0xff]
  %v217 = vld [vmem:[%s3 + $0x70] sm:$0xff]
  %v218 = vld [vmem:[%s3 + $0x78] sm:$0xff]
  %v219 = vld [vmem:[%s4] sm:$0x1]
  %v221 = vsel %vm65, 0.0, 0
  %223 = vmatprep.subr.mxu0 %v204
  %224 = vmatpush1.msra.mxu0 %v203
  %225 = vmatprep.subr.mxu0 %v206
  %226 = vmatpush1.msra.mxu0 %v205
  %227 = vmatprep.subr.mxu0 %v208
  %228 = vmatpush1.msra.mxu0 %v207
  %229 = vmatprep.subr.mxu0 %v210
  %230 = vmatpush1.msra.mxu0 %v209
  %231 = vmatprep.subr.mxu0 %v212
  %232 = vmatpush1.msra.mxu0 %v211
  %233 = vmatprep.subr.mxu0 %v214
  %234 = vmatpush1.msra.mxu0 %v213
  %235 = vmatprep.subr.mxu0 %v216
  %236 = vmatpush1.msra.mxu0 %v215
  %237 = vmatprep.subr.mxu0 %v218
  %238 = vmatpush1.msra.mxu0 %v217
  %239 = vmatprep.subr.mxu0 0.0
  %240 = vmatpush1.msra.mxu0 0.0
  %241 = vmatprep.subr.mxu0 0.0
  %242 = vmatpush1.msra.mxu0 0.0
  %243 = vmatprep.subr.mxu0 0.0
  %244 = vmatpush1.msra.mxu0 0.0
  %245 = vmatprep.subr.mxu0 0.0
  %246 = vmatpush1.msra.mxu0 0.0
  %247 = vmatprep.subr.mxu0 0.0
  %248 = vmatpush1.msra.mxu0 0.0
  %249 = vmatprep.subr.mxu0 0.0
  %250 = vmatpush1.msra.mxu0 0.0
  %251 = vmatprep.subr.mxu0 0.0
  %252 = vmatpush1.msra.mxu0 0.0
  %253 = vmatprep.subr.mxu0 0.0
  %254 = vmatpush1.msra.mxu0 0.0
  %255 = vmatprep.subr.mxu0 0.0
  %256 = vmatpush1.msra.mxu0 0.0
  %257 = vmatprep.subr.mxu0 0.0
  %258 = vmatpush1.msra.mxu0 0.0
  %259 = vmatprep.subr.mxu0 0.0
  %260 = vmatpush1.msra.mxu0 0.0
  %261 = vmatprep.subr.mxu0 0.0
  %262 = vmatpush1.msra.mxu0 0.0
  %263 = vmatprep.subr.mxu0 0.0
  %264 = vmatpush1.msra.mxu0 0.0
  %265 = vmatprep.subr.mxu0 0.0
  %266 = vmatpush1.msra.mxu0 0.0
  %267 = vmatprep.subr.mxu0 0.0
  %268 = vmatpush1.msra.mxu0 0.0
  %269 = vmatprep.subr.mxu0 0.0
  %270 = vmatpush1.msra.mxu0 0.0
  %271 = vmatprep.subr.mxu0 0.0
  %272 = vmatpush1.msra.mxu0 0.0
  %273 = vmatprep.subr.mxu0 0.0
  %274 = vmatpush1.msra.mxu0 0.0
  %275 = vmatprep.subr.mxu0 0.0
  %276 = vmatpush1.msra.mxu0 0.0
  %277 = vmatprep.subr.mxu0 0.0
  %278 = vmatpush1.msra.mxu0 0.0
  %279 = vmatprep.subr.mxu0 0.0
  %280 = vmatpush1.msra.mxu0 0.0
  %281 = vmatprep.subr.mxu0 0.0
  %282 = vmatpush1.msra.mxu0 0.0
  %283 = vmatprep.subr.mxu0 0.0
  %284 = vmatpush1.msra.mxu0 0.0
  %285 = vmatprep.subr.mxu0 0.0
  %286 = vmatpush1.msra.mxu0 0.0
  %287 = vmatprep.mubr.f32.mxu0 0.0
  %288 = vmatmul.mubr.f32.gmra.mrb[0].mxu0 %v221
  %v289 = vpop.f32.mrb[0].mxu0
  %v290 = vadd.f32 0.0, %v289
  %v291 = vpop.f32.mrb[0].mxu0
  %v292 = vadd.f32 0.0, %v291
  %293 = vdwg.mxu0
  %v294 = vadd.f32 %v157, %v290
  %v295 = vxor.u32 %v294, 2147483648
  %v296 = vmul.f32 %v295, 1.442695
  %v297 = vpow.pop %v296
  %v298 = vadd.f32 %v297, 1.0
  %v299 = vrcp.pop %v298
  %v300 = vmul.f32 1.0, %v299
  %v302 = vlaneseq
  %v303 = vshrl.u32 %v302, 7
  %v304 = vsub.s32 0, %v303
  %v305 = vrot.slane %v219, %v304
  %v307 = vadd.f32 %v292, %v305
  %v308 = vmul.f32 %v300, %v307
  %v309 = vadd.f32 %v159, %v308
  %v310 = vtanh.pop %v309
  %v311 = vsub.f32 0.0, %v310
  %313 = vrot.lane.b32.xlu0 %v311, 64
  %v314 = vpop.permute.xlu0 %313
  %v316 = vmul.f32 %v300, %v314
  %318 = vrot.lane.b32.xlu0 %v316, 64
  %v319 = vpop.permute.xlu0 %318
  %v321 = vadd.f32 %v310, %v319
  %v323 = vsel %vm65, %v321, 0
  %325 = vmatprep.subr.mxu0 %v204
  %326 = vmatpush1.msra.mxu0 %v203
  %327 = vmatprep.subr.mxu0 %v206
  %328 = vmatpush1.msra.mxu0 %v205
  %329 = vmatprep.subr.mxu0 %v208
  %330 = vmatpush1.msra.mxu0 %v207
  %331 = vmatprep.subr.mxu0 %v210
  %332 = vmatpush1.msra.mxu0 %v209
  %333 = vmatprep.subr.mxu0 %v212
  %334 = vmatpush1.msra.mxu0 %v211
  %335 = vmatprep.subr.mxu0 %v214
  %336 = vmatpush1.msra.mxu0 %v213
  %337 = vmatprep.subr.mxu0 %v216
  %338 = vmatpush1.msra.mxu0 %v215
  %339 = vmatprep.subr.mxu0 %v218
  %340 = vmatpush1.msra.mxu0 %v217
  %341 = vmatprep.subr.mxu0 0.0
  %342 = vmatpush1.msra.mxu0 0.0
  %343 = vmatprep.subr.mxu0 0.0
  %344 = vmatpush1.msra.mxu0 0.0
  %345 = vmatprep.subr.mxu0 0.0
  %346 = vmatpush1.msra.mxu0 0.0
  %347 = vmatprep.subr.mxu0 0.0
  %348 = vmatpush1.msra.mxu0 0.0
  %349 = vmatprep.subr.mxu0 0.0
  %350 = vmatpush1.msra.mxu0 0.0
  %351 = vmatprep.subr.mxu0 0.0
  %352 = vmatpush1.msra.mxu0 0.0
  %353 = vmatprep.subr.mxu0 0.0
  %354 = vmatpush1.msra.mxu0 0.0
  %355 = vmatprep.subr.mxu0 0.0
  %356 = vmatpush1.msra.mxu0 0.0
  %357 = vmatprep.subr.mxu0 0.0
  %358 = vmatpush1.msra.mxu0 0.0
  %359 = vmatprep.subr.mxu0 0.0
  %360 = vmatpush1.msra.mxu0 0.0
  %361 = vmatprep.subr.mxu0 0.0
  %362 = vmatpush1.msra.mxu0 0.0
  %363 = vmatprep.subr.mxu0 0.0
  %364 = vmatpush1.msra.mxu0 0.0
  %365 = vmatprep.subr.mxu0 0.0
  %366 = vmatpush1.msra.mxu0 0.0
  %367 = vmatprep.subr.mxu0 0.0
  %368 = vmatpush1.msra.mxu0 0.0
  %369 = vmatprep.subr.mxu0 0.0
  %370 = vmatpush1.msra.mxu0 0.0
  %371 = vmatprep.subr.mxu0 0.0
  %372 = vmatpush1.msra.mxu0 0.0
  %373 = vmatprep.subr.mxu0 0.0
  %374 = vmatpush1.msra.mxu0 0.0
  %375 = vmatprep.subr.mxu0 0.0
  %376 = vmatpush1.msra.mxu0 0.0
  %377 = vmatprep.subr.mxu0 0.0
  %378 = vmatpush1.msra.mxu0 0.0
  %379 = vmatprep.subr.mxu0 0.0
  %380 = vmatpush1.msra.mxu0 0.0
  %381 = vmatprep.subr.mxu0 0.0
  %382 = vmatpush1.msra.mxu0 0.0
  %383 = vmatprep.subr.mxu0 0.0
  %384 = vmatpush1.msra.mxu0 0.0
  %385 = vmatprep.subr.mxu0 0.0
  %386 = vmatpush1.msra.mxu0 0.0
  %387 = vmatprep.subr.mxu0 0.0
  %388 = vmatpush1.msra.mxu0 0.0
  %389 = vmatprep.mubr.f32.mxu0 0.0
  %390 = vmatmul.mubr.f32.gmra.mrb[0].mxu0 %v323
  %v391 = vpop.f32.mrb[0].mxu0
  %v392 = vadd.f32 0.0, %v391
  %v393 = vpop.f32.mrb[0].mxu0
  %v394 = vadd.f32 0.0, %v393
  %395 = vdwg.mxu0
  %v396 = vadd.f32 %v163, %v392
  %v397 = vxor.u32 %v396, 2147483648
  %v398 = vmul.f32 %v397, 1.442695
  %v399 = vpow.pop %v398
  %v400 = vadd.f32 %v399, 1.0
  %v401 = vrcp.pop %v400
  %v402 = vmul.f32 1.0, %v401
  %v403 = vadd.f32 %v394, %v305
  %v404 = vmul.f32 %v402, %v403
  %v405 = vadd.f32 %v165, %v404
  %v406 = vtanh.pop %v405
  %v407 = vsub.f32 %v321, %v406
  %409 = vrot.lane.b32.xlu0 %v407, 64
  %v410 = vpop.permute.xlu0 %409
  %v412 = vmul.f32 %v402, %v410
  %414 = vrot.lane.b32.xlu0 %v412, 64
  %v415 = vpop.permute.xlu0 %414
  %v417 = vadd.f32 %v406, %v415
  %v419 = vsel %vm65, %v417, 0
  %421 = vmatprep.subr.mxu0 %v204
  %422 = vmatpush1.msra.mxu0 %v203
  %423 = vmatprep.subr.mxu0 %v206
  %424 = vmatpush1.msra.mxu0 %v205
  %425 = vmatprep.subr.mxu0 %v208
  %426 = vmatpush1.msra.mxu0 %v207
  %427 = vmatprep.subr.mxu0 %v210
  %428 = vmatpush1.msra.mxu0 %v209
  %429 = vmatprep.subr.mxu0 %v212
  %430 = vmatpush1.msra.mxu0 %v211
  %431 = vmatprep.subr.mxu0 %v214
  %432 = vmatpush1.msra.mxu0 %v213
  %433 = vmatprep.subr.mxu0 %v216
  %434 = vmatpush1.msra.mxu0 %v215
  %435 = vmatprep.subr.mxu0 %v218
  %436 = vmatpush1.msra.mxu0 %v217
  %437 = vmatprep.subr.mxu0 0.0
  %438 = vmatpush1.msra.mxu0 0.0
  %439 = vmatprep.subr.mxu0 0.0
  %440 = vmatpush1.msra.mxu0 0.0
  %441 = vmatprep.subr.mxu0 0.0
  %442 = vmatpush1.msra.mxu0 0.0
  %443 = vmatprep.subr.mxu0 0.0
  %444 = vmatpush1.msra.mxu0 0.0
  %445 = vmatprep.subr.mxu0 0.0
  %446 = vmatpush1.msra.mxu0 0.0
  %447 = vmatprep.subr.mxu0 0.0
  %448 = vmatpush1.msra.mxu0 0.0
  %449 = vmatprep.subr.mxu0 0.0
  %450 = vmatpush1.msra.mxu0 0.0
  %451 = vmatprep.subr.mxu0 0.0
  %452 = vmatpush1.msra.mxu0 0.0
  %453 = vmatprep.subr.mxu0 0.0
  %454 = vmatpush1.msra.mxu0 0.0
  %455 = vmatprep.subr.mxu0 0.0
  %456 = vmatpush1.msra.mxu0 0.0
  %457 = vmatprep.subr.mxu0 0.0
  %458 = vmatpush1.msra.mxu0 0.0
  %459 = vmatprep.subr.mxu0 0.0
  %460 = vmatpush1.msra.mxu0 0.0
  %461 = vmatprep.subr.mxu0 0.0
  %462 = vmatpush1.msra.mxu0 0.0
  %463 = vmatprep.subr.mxu0 0.0
  %464 = vmatpush1.msra.mxu0 0.0
  %465 = vmatprep.subr.mxu0 0.0
  %466 = vmatpush1.msra.mxu0 0.0
  %467 = vmatprep.subr.mxu0 0.0
  %468 = vmatpush1.msra.mxu0 0.0
  %469 = vmatprep.subr.mxu0 0.0
  %470 = vmatpush1.msra.mxu0 0.0
  %471 = vmatprep.subr.mxu0 0.0
  %472 = vmatpush1.msra.mxu0 0.0
  %473 = vmatprep.subr.mxu0 0.0
  %474 = vmatpush1.msra.mxu0 0.0
  %475 = vmatprep.subr.mxu0 0.0
  %476 = vmatpush1.msra.mxu0 0.0
  %477 = vmatprep.subr.mxu0 0.0
  %478 = vmatpush1.msra.mxu0 0.0
  %479 = vmatprep.subr.mxu0 0.0
  %480 = vmatpush1.msra.mxu0 0.0
  %481 = vmatprep.subr.mxu0 0.0
  %482 = vmatpush1.msra.mxu0 0.0
  %483 = vmatprep.subr.mxu0 0.0
  %484 = vmatpush1.msra.mxu0 0.0
  %485 = vmatprep.mubr.f32.mxu0 0.0
  %486 = vmatmul.mubr.f32.gmra.mrb[0].mxu0 %v419
  %v487 = vpop.f32.mrb[0].mxu0
  %v488 = vadd.f32 0.0, %v487
  %v489 = vpop.f32.mrb[0].mxu0
  %v490 = vadd.f32 0.0, %v489
  %491 = vdwg.mxu0
  %v492 = vadd.f32 %v169, %v488
  %v493 = vxor.u32 %v492, 2147483648
  %v494 = vmul.f32 %v493, 1.442695
  %v495 = vpow.pop %v494
  %v496 = vadd.f32 %v495, 1.0
  %v497 = vrcp.pop %v496
  %v498 = vmul.f32 1.0, %v497
  %v499 = vadd.f32 %v490, %v305
  %v500 = vmul.f32 %v498, %v499
  %v501 = vadd.f32 %v171, %v500
  %v502 = vtanh.pop %v501
  %v503 = vsub.f32 %v417, %v502
  %505 = vrot.lane.b32.xlu0 %v503, 64
  %v506 = vpop.permute.xlu0 %505
  %v508 = vmul.f32 %v498, %v506
  %510 = vrot.lane.b32.xlu0 %v508, 64
  %v511 = vpop.permute.xlu0 %510
  %v513 = vadd.f32 %v502, %v511
  %v515 = vsel %vm65, %v513, 0
  %517 = vmatprep.subr.mxu0 %v204
  %518 = vmatpush1.msra.mxu0 %v203
  %519 = vmatprep.subr.mxu0 %v206
  %520 = vmatpush1.msra.mxu0 %v205
  %521 = vmatprep.subr.mxu0 %v208
  %522 = vmatpush1.msra.mxu0 %v207
  %523 = vmatprep.subr.mxu0 %v210
  %524 = vmatpush1.msra.mxu0 %v209
  %525 = vmatprep.subr.mxu0 %v212
  %526 = vmatpush1.msra.mxu0 %v211
  %527 = vmatprep.subr.mxu0 %v214
  %528 = vmatpush1.msra.mxu0 %v213
  %529 = vmatprep.subr.mxu0 %v216
  %530 = vmatpush1.msra.mxu0 %v215
  %531 = vmatprep.subr.mxu0 %v218
  %532 = vmatpush1.msra.mxu0 %v217
  %533 = vmatprep.subr.mxu0 0.0
  %534 = vmatpush1.msra.mxu0 0.0
  %535 = vmatprep.subr.mxu0 0.0
  %536 = vmatpush1.msra.mxu0 0.0
  %537 = vmatprep.subr.mxu0 0.0
  %538 = vmatpush1.msra.mxu0 0.0
  %539 = vmatprep.subr.mxu0 0.0
  %540 = vmatpush1.msra.mxu0 0.0
  %541 = vmatprep.subr.mxu0 0.0
  %542 = vmatpush1.msra.mxu0 0.0
  %543 = vmatprep.subr.mxu0 0.0
  %544 = vmatpush1.msra.mxu0 0.0
  %545 = vmatprep.subr.mxu0 0.0
  %546 = vmatpush1.msra.mxu0 0.0
  %547 = vmatprep.subr.mxu0 0.0
  %548 = vmatpush1.msra.mxu0 0.0
  %549 = vmatprep.subr.mxu0 0.0
  %550 = vmatpush1.msra.mxu0 0.0
  %551 = vmatprep.subr.mxu0 0.0
  %552 = vmatpush1.msra.mxu0 0.0
  %553 = vmatprep.subr.mxu0 0.0
  %554 = vmatpush1.msra.mxu0 0.0
  %555 = vmatprep.subr.mxu0 0.0
  %556 = vmatpush1.msra.mxu0 0.0
  %557 = vmatprep.subr.mxu0 0.0
  %558 = vmatpush1.msra.mxu0 0.0
  %559 = vmatprep.subr.mxu0 0.0
  %560 = vmatpush1.msra.mxu0 0.0
  %561 = vmatprep.subr.mxu0 0.0
  %562 = vmatpush1.msra.mxu0 0.0
  %563 = vmatprep.subr.mxu0 0.0
  %564 = vmatpush1.msra.mxu0 0.0
  %565 = vmatprep.subr.mxu0 0.0
  %566 = vmatpush1.msra.mxu0 0.0
  %567 = vmatprep.subr.mxu0 0.0
  %568 = vmatpush1.msra.mxu0 0.0
  %569 = vmatprep.subr.mxu0 0.0
  %570 = vmatpush1.msra.mxu0 0.0
  %571 = vmatprep.subr.mxu0 0.0
  %572 = vmatpush1.msra.mxu0 0.0
  %573 = vmatprep.subr.mxu0 0.0
  %574 = vmatpush1.msra.mxu0 0.0
  %575 = vmatprep.subr.mxu0 0.0
  %576 = vmatpush1.msra.mxu0 0.0
  %577 = vmatprep.subr.mxu0 0.0
  %578 = vmatpush1.msra.mxu0 0.0
  %579 = vmatprep.subr.mxu0 0.0
  %580 = vmatpush1.msra.mxu0 0.0
  %581 = vmatprep.mubr.f32.mxu0 0.0
  %582 = vmatmul.mubr.f32.gmra.mrb[0].mxu0 %v515
  %v583 = vpop.f32.mrb[0].mxu0
  %v584 = vadd.f32 0.0, %v583
  %v585 = vpop.f32.mrb[0].mxu0
  %v586 = vadd.f32 0.0, %v585
  %587 = vdwg.mxu0
  %v588 = vadd.f32 %v175, %v584
  %v589 = vxor.u32 %v588, 2147483648
  %v590 = vmul.f32 %v589, 1.442695
  %v591 = vpow.pop %v590
  %v592 = vadd.f32 %v591, 1.0
  %v593 = vrcp.pop %v592
  %v594 = vmul.f32 1.0, %v593
  %v595 = vadd.f32 %v586, %v305
  %v596 = vmul.f32 %v594, %v595
  %v597 = vadd.f32 %v177, %v596
  %v598 = vtanh.pop %v597
  %v599 = vsub.f32 %v513, %v598
  %601 = vrot.lane.b32.xlu0 %v599, 64
  %v602 = vpop.permute.xlu0 %601
  %v604 = vmul.f32 %v594, %v602
  %606 = vrot.lane.b32.xlu0 %v604, 64
  %v607 = vpop.permute.xlu0 %606
  %v609 = vadd.f32 %v598, %v607
  %v611 = vsel %vm65, %v609, 0
  %613 = vmatprep.subr.mxu0 %v204
  %614 = vmatpush1.msra.mxu0 %v203
  %615 = vmatprep.subr.mxu0 %v206
  %616 = vmatpush1.msra.mxu0 %v205
  %617 = vmatprep.subr.mxu0 %v208
  %618 = vmatpush1.msra.mxu0 %v207
  %619 = vmatprep.subr.mxu0 %v210
  %620 = vmatpush1.msra.mxu0 %v209
  %621 = vmatprep.subr.mxu0 %v212
  %622 = vmatpush1.msra.mxu0 %v211
  %623 = vmatprep.subr.mxu0 %v214
  %624 = vmatpush1.msra.mxu0 %v213
  %625 = vmatprep.subr.mxu0 %v216
  %626 = vmatpush1.msra.mxu0 %v215
  %627 = vmatprep.subr.mxu0 %v218
  %628 = vmatpush1.msra.mxu0 %v217
  %629 = vmatprep.subr.mxu0 0.0
  %630 = vmatpush1.msra.mxu0 0.0
  %631 = vmatprep.subr.mxu0 0.0
  %632 = vmatpush1.msra.mxu0 0.0
  %633 = vmatprep.subr.mxu0 0.0
  %634 = vmatpush1.msra.mxu0 0.0
  %635 = vmatprep.subr.mxu0 0.0
  %636 = vmatpush1.msra.mxu0 0.0
  %637 = vmatprep.subr.mxu0 0.0
  %638 = vmatpush1.msra.mxu0 0.0
  %639 = vmatprep.subr.mxu0 0.0
  %640 = vmatpush1.msra.mxu0 0.0
  %641 = vmatprep.subr.mxu0 0.0
  %642 = vmatpush1.msra.mxu0 0.0
  %643 = vmatprep.subr.mxu0 0.0
  %644 = vmatpush1.msra.mxu0 0.0
  %645 = vmatprep.subr.mxu0 0.0
  %646 = vmatpush1.msra.mxu0 0.0
  %647 = vmatprep.subr.mxu0 0.0
  %648 = vmatpush1.msra.mxu0 0.0
  %649 = vmatprep.subr.mxu0 0.0
  %650 = vmatpush1.msra.mxu0 0.0
  %651 = vmatprep.subr.mxu0 0.0
  %652 = vmatpush1.msra.mxu0 0.0
  %653 = vmatprep.subr.mxu0 0.0
  %654 = vmatpush1.msra.mxu0 0.0
  %655 = vmatprep.subr.mxu0 0.0
  %656 = vmatpush1.msra.mxu0 0.0
  %657 = vmatprep.subr.mxu0 0.0
  %658 = vmatpush1.msra.mxu0 0.0
  %659 = vmatprep.subr.mxu0 0.0
  %660 = vmatpush1.msra.mxu0 0.0
  %661 = vmatprep.subr.mxu0 0.0
  %662 = vmatpush1.msra.mxu0 0.0
  %663 = vmatprep.subr.mxu0 0.0
  %664 = vmatpush1.msra.mxu0 0.0
  %665 = vmatprep.subr.mxu0 0.0
  %666 = vmatpush1.msra.mxu0 0.0
  %667 = vmatprep.subr.mxu0 0.0
  %668 = vmatpush1.msra.mxu0 0.0
  %669 = vmatprep.subr.mxu0 0.0
  %670 = vmatpush1.msra.mxu0 0.0
  %671 = vmatprep.subr.mxu0 0.0
  %672 = vmatpush1.msra.mxu0 0.0
  %673 = vmatprep.subr.mxu0 0.0
  %674 = vmatpush1.msra.mxu0 0.0
  %675 = vmatprep.subr.mxu0 0.0
  %676 = vmatpush1.msra.mxu0 0.0
  %677 = vmatprep.mubr.f32.mxu0 0.0
  %678 = vmatmul.mubr.f32.gmra.mrb[0].mxu0 %v611
  %v679 = vpop.f32.mrb[0].mxu0
  %v680 = vadd.f32 0.0, %v679
  %v681 = vpop.f32.mrb[0].mxu0
  %v682 = vadd.f32 0.0, %v681
  %683 = vdwg.mxu0
  %v684 = vadd.f32 %v181, %v680
  %v685 = vxor.u32 %v684, 2147483648
  %v686 = vmul.f32 %v685, 1.442695
  %v687 = vpow.pop %v686
  %v688 = vadd.f32 %v687, 1.0
  %v689 = vrcp.pop %v688
  %v690 = vmul.f32 1.0, %v689
  %v691 = vadd.f32 %v682, %v305
  %v692 = vmul.f32 %v690, %v691
  %v693 = vadd.f32 %v183, %v692
  %v694 = vtanh.pop %v693
  %v695 = vsub.f32 %v609, %v694
  %697 = vrot.lane.b32.xlu0 %v695, 64
  %v698 = vpop.permute.xlu0 %697
  %v700 = vmul.f32 %v690, %v698
  %702 = vrot.lane.b32.xlu0 %v700, 64
  %v703 = vpop.permute.xlu0 %702
  %v705 = vadd.f32 %v694, %v703
  %v707 = vsel %vm65, %v705, 0
  %709 = vmatprep.subr.mxu0 %v204
  %710 = vmatpush1.msra.mxu0 %v203
  %711 = vmatprep.subr.mxu0 %v206
  %712 = vmatpush1.msra.mxu0 %v205
  %713 = vmatprep.subr.mxu0 %v208
  %714 = vmatpush1.msra.mxu0 %v207
  %715 = vmatprep.subr.mxu0 %v210
  %716 = vmatpush1.msra.mxu0 %v209
  %717 = vmatprep.subr.mxu0 %v212
  %718 = vmatpush1.msra.mxu0 %v211
  %719 = vmatprep.subr.mxu0 %v214
  %720 = vmatpush1.msra.mxu0 %v213
  %721 = vmatprep.subr.mxu0 %v216
  %722 = vmatpush1.msra.mxu0 %v215
  %723 = vmatprep.subr.mxu0 %v218
  %724 = vmatpush1.msra.mxu0 %v217
  %725 = vmatprep.subr.mxu0 0.0
  %726 = vmatpush1.msra.mxu0 0.0
  %727 = vmatprep.subr.mxu0 0.0
  %728 = vmatpush1.msra.mxu0 0.0
  %729 = vmatprep.subr.mxu0 0.0
  %730 = vmatpush1.msra.mxu0 0.0
  %731 = vmatprep.subr.mxu0 0.0
  %732 = vmatpush1.msra.mxu0 0.0
  %733 = vmatprep.subr.mxu0 0.0
  %734 = vmatpush1.msra.mxu0 0.0
  %735 = vmatprep.subr.mxu0 0.0
  %736 = vmatpush1.msra.mxu0 0.0
  %737 = vmatprep.subr.mxu0 0.0
  %738 = vmatpush1.msra.mxu0 0.0
  %739 = vmatprep.subr.mxu0 0.0
  %740 = vmatpush1.msra.mxu0 0.0
  %741 = vmatprep.subr.mxu0 0.0
  %742 = vmatpush1.msra.mxu0 0.0
  %743 = vmatprep.subr.mxu0 0.0
  %744 = vmatpush1.msra.mxu0 0.0
  %745 = vmatprep.subr.mxu0 0.0
  %746 = vmatpush1.msra.mxu0 0.0
  %747 = vmatprep.subr.mxu0 0.0
  %748 = vmatpush1.msra.mxu0 0.0
  %749 = vmatprep.subr.mxu0 0.0
  %750 = vmatpush1.msra.mxu0 0.0
  %751 = vmatprep.subr.mxu0 0.0
  %752 = vmatpush1.msra.mxu0 0.0
  %753 = vmatprep.subr.mxu0 0.0
  %754 = vmatpush1.msra.mxu0 0.0
  %755 = vmatprep.subr.mxu0 0.0
  %756 = vmatpush1.msra.mxu0 0.0
  %757 = vmatprep.subr.mxu0 0.0
  %758 = vmatpush1.msra.mxu0 0.0
  %759 = vmatprep.subr.mxu0 0.0
  %760 = vmatpush1.msra.mxu0 0.0
  %761 = vmatprep.subr.mxu0 0.0
  %762 = vmatpush1.msra.mxu0 0.0
  %763 = vmatprep.subr.mxu0 0.0
  %764 = vmatpush1.msra.mxu0 0.0
  %765 = vmatprep.subr.mxu0 0.0
  %766 = vmatpush1.msra.mxu0 0.0
  %767 = vmatprep.subr.mxu0 0.0
  %768 = vmatpush1.msra.mxu0 0.0
  %769 = vmatprep.subr.mxu0 0.0
  %770 = vmatpush1.msra.mxu0 0.0
  %771 = vmatprep.subr.mxu0 0.0
  %772 = vmatpush1.msra.mxu0 0.0
  %773 = vmatprep.mubr.f32.mxu0 0.0
  %774 = vmatmul.mubr.f32.gmra.mrb[0].mxu0 %v707
  %v775 = vpop.f32.mrb[0].mxu0
  %v776 = vadd.f32 0.0, %v775
  %v777 = vpop.f32.mrb[0].mxu0
  %v778 = vadd.f32 0.0, %v777
  %779 = vdwg.mxu0
  %v780 = vadd.f32 %v187, %v776
  %v781 = vxor.u32 %v780, 2147483648
  %v782 = vmul.f32 %v781, 1.442695
  %v783 = vpow.pop %v782
  %v784 = vadd.f32 %v783, 1.0
  %v785 = vrcp.pop %v784
  %v786 = vmul.f32 1.0, %v785
  %v787 = vadd.f32 %v778, %v305
  %v788 = vmul.f32 %v786, %v787
  %v789 = vadd.f32 %v189, %v788
  %v790 = vtanh.pop %v789
  %v791 = vsub.f32 %v705, %v790
  %793 = vrot.lane.b32.xlu0 %v791, 64
  %v794 = vpop.permute.xlu0 %793
  %v796 = vmul.f32 %v786, %v794
  %798 = vrot.lane.b32.xlu0 %v796, 64
  %v799 = vpop.permute.xlu0 %798
  %v801 = vadd.f32 %v790, %v799
  %v803 = vsel %vm65, %v801, 0
  %805 = vmatprep.subr.mxu0 %v204
  %806 = vmatpush1.msra.mxu0 %v203
  %807 = vmatprep.subr.mxu0 %v206
  %808 = vmatpush1.msra.mxu0 %v205
  %809 = vmatprep.subr.mxu0 %v208
  %810 = vmatpush1.msra.mxu0 %v207
  %811 = vmatprep.subr.mxu0 %v210
  %812 = vmatpush1.msra.mxu0 %v209
  %813 = vmatprep.subr.mxu0 %v212
  %814 = vmatpush1.msra.mxu0 %v211
  %815 = vmatprep.subr.mxu0 %v214
  %816 = vmatpush1.msra.mxu0 %v213
  %817 = vmatprep.subr.mxu0 %v216
  %818 = vmatpush1.msra.mxu0 %v215
  %819 = vmatprep.subr.mxu0 %v218
  %820 = vmatpush1.msra.mxu0 %v217
  %821 = vmatprep.subr.mxu0 0.0
  %822 = vmatpush1.msra.mxu0 0.0
  %823 = vmatprep.subr.mxu0 0.0
  %824 = vmatpush1.msra.mxu0 0.0
  %825 = vmatprep.subr.mxu0 0.0
  %826 = vmatpush1.msra.mxu0 0.0
  %827 = vmatprep.subr.mxu0 0.0
  %828 = vmatpush1.msra.mxu0 0.0
  %829 = vmatprep.subr.mxu0 0.0
  %830 = vmatpush1.msra.mxu0 0.0
  %831 = vmatprep.subr.mxu0 0.0
  %832 = vmatpush1.msra.mxu0 0.0
  %833 = vmatprep.subr.mxu0 0.0
  %834 = vmatpush1.msra.mxu0 0.0
  %835 = vmatprep.subr.mxu0 0.0
  %836 = vmatpush1.msra.mxu0 0.0
  %837 = vmatprep.subr.mxu0 0.0
  %838 = vmatpush1.msra.mxu0 0.0
  %839 = vmatprep.subr.mxu0 0.0
  %840 = vmatpush1.msra.mxu0 0.0
  %841 = vmatprep.subr.mxu0 0.0
  %842 = vmatpush1.msra.mxu0 0.0
  %843 = vmatprep.subr.mxu0 0.0
  %844 = vmatpush1.msra.mxu0 0.0
  %845 = vmatprep.subr.mxu0 0.0
  %846 = vmatpush1.msra.mxu0 0.0
  %847 = vmatprep.subr.mxu0 0.0
  %848 = vmatpush1.msra.mxu0 0.0
  %849 = vmatprep.subr.mxu0 0.0
  %850 = vmatpush1.msra.mxu0 0.0
  %851 = vmatprep.subr.mxu0 0.0
  %852 = vmatpush1.msra.mxu0 0.0
  %853 = vmatprep.subr.mxu0 0.0
  %854 = vmatpush1.msra.mxu0 0.0
  %855 = vmatprep.subr.mxu0 0.0
  %856 = vmatpush1.msra.mxu0 0.0
  %857 = vmatprep.subr.mxu0 0.0
  %858 = vmatpush1.msra.mxu0 0.0
  %859 = vmatprep.subr.mxu0 0.0
  %860 = vmatpush1.msra.mxu0 0.0
  %861 = vmatprep.subr.mxu0 0.0
  %862 = vmatpush1.msra.mxu0 0.0
  %863 = vmatprep.subr.mxu0 0.0
  %864 = vmatpush1.msra.mxu0 0.0
  %865 = vmatprep.subr.mxu0 0.0
  %866 = vmatpush1.msra.mxu0 0.0
  %867 = vmatprep.subr.mxu0 0.0
  %868 = vmatpush1.msra.mxu0 0.0
  %869 = vmatprep.mubr.f32.mxu0 0.0
  %870 = vmatmul.mubr.f32.gmra.mrb[0].mxu0 %v803
  %v871 = vpop.f32.mrb[0].mxu0
  %v872 = vadd.f32 0.0, %v871
  %v873 = vpop.f32.mrb[0].mxu0
  %v874 = vadd.f32 0.0, %v873
  %875 = vdwg.mxu0
  %v876 = vadd.f32 %v193, %v872
  %v877 = vxor.u32 %v876, 2147483648
  %v878 = vmul.f32 %v877, 1.442695
  %v879 = vpow.pop %v878
  %v880 = vadd.f32 %v879, 1.0
  %v881 = vrcp.pop %v880
  %v882 = vmul.f32 1.0, %v881
  %v883 = vadd.f32 %v874, %v305
  %v884 = vmul.f32 %v882, %v883
  %v885 = vadd.f32 %v195, %v884
  %v886 = vtanh.pop %v885
  %v887 = vsub.f32 %v801, %v886
  %889 = vrot.lane.b32.xlu0 %v887, 64
  %v890 = vpop.permute.xlu0 %889
  %v892 = vmul.f32 %v882, %v890
  %894 = vrot.lane.b32.xlu0 %v892, 64
  %v895 = vpop.permute.xlu0 %894
  %v897 = vadd.f32 %v886, %v895
  %v899 = vsel %vm65, %v897, 0
  %901 = vmatprep.subr.mxu0 %v204
  %902 = vmatpush1.msra.mxu0 %v203
  %903 = vmatprep.subr.mxu0 %v206
  %904 = vmatpush1.msra.mxu0 %v205
  %905 = vmatprep.subr.mxu0 %v208
  %906 = vmatpush1.msra.mxu0 %v207
  %907 = vmatprep.subr.mxu0 %v210
  %908 = vmatpush1.msra.mxu0 %v209
  %909 = vmatprep.subr.mxu0 %v212
  %910 = vmatpush1.msra.mxu0 %v211
  %911 = vmatprep.subr.mxu0 %v214
  %912 = vmatpush1.msra.mxu0 %v213
  %913 = vmatprep.subr.mxu0 %v216
  %914 = vmatpush1.msra.mxu0 %v215
  %915 = vmatprep.subr.mxu0 %v218
  %916 = vmatpush1.msra.mxu0 %v217
  %917 = vmatprep.subr.mxu0 0.0
  %918 = vmatpush1.msra.mxu0 0.0
  %919 = vmatprep.subr.mxu0 0.0
  %920 = vmatpush1.msra.mxu0 0.0
  %921 = vmatprep.subr.mxu0 0.0
  %922 = vmatpush1.msra.mxu0 0.0
  %923 = vmatprep.subr.mxu0 0.0
  %924 = vmatpush1.msra.mxu0 0.0
  %925 = vmatprep.subr.mxu0 0.0
  %926 = vmatpush1.msra.mxu0 0.0
  %927 = vmatprep.subr.mxu0 0.0
  %928 = vmatpush1.msra.mxu0 0.0
  %929 = vmatprep.subr.mxu0 0.0
  %930 = vmatpush1.msra.mxu0 0.0
  %931 = vmatprep.subr.mxu0 0.0
  %932 = vmatpush1.msra.mxu0 0.0
  %933 = vmatprep.subr.mxu0 0.0
  %934 = vmatpush1.msra.mxu0 0.0
  %935 = vmatprep.subr.mxu0 0.0
  %936 = vmatpush1.msra.mxu0 0.0
  %937 = vmatprep.subr.mxu0 0.0
  %938 = vmatpush1.msra.mxu0 0.0
  %939 = vmatprep.subr.mxu0 0.0
  %940 = vmatpush1.msra.mxu0 0.0
  %941 = vmatprep.subr.mxu0 0.0
  %942 = vmatpush1.msra.mxu0 0.0
  %943 = vmatprep.subr.mxu0 0.0
  %944 = vmatpush1.msra.mxu0 0.0
  %945 = vmatprep.subr.mxu0 0.0
  %946 = vmatpush1.msra.mxu0 0.0
  %947 = vmatprep.subr.mxu0 0.0
  %948 = vmatpush1.msra.mxu0 0.0
  %949 = vmatprep.subr.mxu0 0.0
  %950 = vmatpush1.msra.mxu0 0.0
  %951 = vmatprep.subr.mxu0 0.0
  %952 = vmatpush1.msra.mxu0 0.0
  %953 = vmatprep.subr.mxu0 0.0
  %954 = vmatpush1.msra.mxu0 0.0
  %955 = vmatprep.subr.mxu0 0.0
  %956 = vmatpush1.msra.mxu0 0.0
  %957 = vmatprep.subr.mxu0 0.0
  %958 = vmatpush1.msra.mxu0 0.0
  %959 = vmatprep.subr.mxu0 0.0
  %960 = vmatpush1.msra.mxu0 0.0
  %961 = vmatprep.subr.mxu0 0.0
  %962 = vmatpush1.msra.mxu0 0.0
  %963 = vmatprep.subr.mxu0 0.0
  %964 = vmatpush1.msra.mxu0 0.0
  %965 = vmatprep.mubr.f32.mxu0 0.0
  %966 = vmatmul.mubr.f32.gmra.mrb[0].mxu0 %v899
  %v967 = vpop.f32.mrb[0].mxu0
  %v968 = vadd.f32 0.0, %v967
  %v969 = vpop.f32.mrb[0].mxu0
  %v970 = vadd.f32 0.0, %v969
  %971 = vdwg.mxu0
  %v972 = vadd.f32 %v199, %v968
  %v973 = vxor.u32 %v972, 2147483648
  %v974 = vmul.f32 %v973, 1.442695
  %v975 = vpow.pop %v974
  %v976 = vadd.f32 %v975, 1.0
  %v977 = vrcp.pop %v976
  %v978 = vmul.f32 1.0, %v977
  %v979 = vadd.f32 %v970, %v305
  %v980 = vmul.f32 %v978, %v979
  %v981 = vadd.f32 %v201, %v980
  %v982 = vtanh.pop %v981
  %v983 = vsub.f32 %v897, %v982
  %985 = vrot.lane.b32.xlu0 %v983, 64
  %v986 = vpop.permute.xlu0 %985
  %v988 = vmul.f32 %v978, %v986
  %990 = vrot.lane.b32.xlu0 %v988, 64
  %v991 = vpop.permute.xlu0 %990
  %v993 = vadd.f32 %v982, %v991
  %vm994 = vcmask 261120
  %995 = vst.msk [vmem:[%s7] sm:$0xff] %vm994, %v321
  %996 = vst.msk [vmem:[%s7 + $0x8] sm:$0xff] %vm994, %v417
  %997 = vst.msk [vmem:[%s7 + $0x10] sm:$0xff] %vm994, %v513
  %998 = vst.msk [vmem:[%s7 + $0x18] sm:$0xff] %vm994, %v609
  %999 = vst.msk [vmem:[%s7 + $0x20] sm:$0xff] %vm994, %v705
  %1000 = vst.msk [vmem:[%s7 + $0x28] sm:$0xff] %vm994, %v801
  %1001 = vst.msk [vmem:[%s7 + $0x30] sm:$0xff] %vm994, %v897
  %1002 = vst.msk [vmem:[%s7 + $0x38] sm:$0xff] %vm994, %v993
  %1004 = vrot.lane.b32.xlu0 %v993, 96
  %v1005 = vpop.permute.xlu0 %1004
  %1006 = vrot.lane.b32.xlu0 %v897, 96
  %v1007 = vpop.permute.xlu0 %1006
  %1008 = vrot.lane.b32.xlu0 %v801, 96
  %v1009 = vpop.permute.xlu0 %1008
  %1010 = vrot.lane.b32.xlu0 %v705, 96
  %v1011 = vpop.permute.xlu0 %1010
  %1012 = vrot.lane.b32.xlu0 %v609, 96
  %v1013 = vpop.permute.xlu0 %1012
  %1014 = vrot.lane.b32.xlu0 %v513, 96
  %v1015 = vpop.permute.xlu0 %1014
  %1016 = vrot.lane.b32.xlu0 %v417, 96
  %v1017 = vpop.permute.xlu0 %1016
  %1018 = vrot.lane.b32.xlu0 %v321, 96
  %v1019 = vpop.permute.xlu0 %1018
  %1028 = vst.msk [vmem:[%s8] sm:$0xff] %vm994, %v1005
  %1029 = vst.msk [vmem:[%s8 + $0x8] sm:$0xff] %vm994, %v1007
  %1030 = vst.msk [vmem:[%s8 + $0x10] sm:$0xff] %vm994, %v1009
  %1031 = vst.msk [vmem:[%s8 + $0x18] sm:$0xff] %vm994, %v1011
  %1032 = vst.msk [vmem:[%s8 + $0x20] sm:$0xff] %vm994, %v1013
  %1033 = vst.msk [vmem:[%s8 + $0x28] sm:$0xff] %vm994, %v1015
  %1034 = vst.msk [vmem:[%s8 + $0x30] sm:$0xff] %vm994, %v1017
  %1035 = vst.msk [vmem:[%s8 + $0x38] sm:$0xff] %vm994, %v1019
  %v1036 = vld [vmem:[%s5] sm:$0xff]
  %v1037 = vld [vmem:[%s5 + $0x8] sm:$0xff]
  %v1038 = vld [vmem:[%s5 + $0x10] sm:$0xff]
  %v1039 = vld [vmem:[%s5 + $0x18] sm:$0xff]
  %v1040 = vld [vmem:[%s5 + $0x20] sm:$0xff]
  %v1041 = vld [vmem:[%s5 + $0x28] sm:$0xff]
  %v1042 = vld [vmem:[%s5 + $0x30] sm:$0xff]
  %v1043 = vld [vmem:[%s5 + $0x38] sm:$0xff]
  %v1044 = vld [vmem:[%s6] sm:$0x1]
  %v1046 = vlaneseq
  %v1047 = vshrl.u32 %v1046, 7
  %v1048 = vsub.s32 0, %v1047
  %v1049 = vrot.slane %v1044, %v1048
  %v1051 = vsel %vm65, %v993, 0
  %1053 = vmatprep.subr.mxu0 0.0
  %1054 = vmatpush1.msra.mxu0 %v1036
  %1055 = vmatprep.subr.mxu0 0.0
  %1056 = vmatpush1.msra.mxu0 %v1037
  %1057 = vmatprep.subr.mxu0 0.0
  %1058 = vmatpush1.msra.mxu0 %v1038
  %1059 = vmatprep.subr.mxu0 0.0
  %1060 = vmatpush1.msra.mxu0 %v1039
  %1061 = vmatprep.subr.mxu0 0.0
  %1062 = vmatpush1.msra.mxu0 %v1040
  %1063 = vmatprep.subr.mxu0 0.0
  %1064 = vmatpush1.msra.mxu0 %v1041
  %1065 = vmatprep.subr.mxu0 0.0
  %1066 = vmatpush1.msra.mxu0 %v1042
  %1067 = vmatprep.subr.mxu0 0.0
  %1068 = vmatpush1.msra.mxu0 %v1043
  %1069 = vmatprep.subr.mxu0 0.0
  %1070 = vmatpush1.msra.mxu0 0.0
  %1071 = vmatprep.subr.mxu0 0.0
  %1072 = vmatpush1.msra.mxu0 0.0
  %1073 = vmatprep.subr.mxu0 0.0
  %1074 = vmatpush1.msra.mxu0 0.0
  %1075 = vmatprep.subr.mxu0 0.0
  %1076 = vmatpush1.msra.mxu0 0.0
  %1077 = vmatprep.subr.mxu0 0.0
  %1078 = vmatpush1.msra.mxu0 0.0
  %1079 = vmatprep.subr.mxu0 0.0
  %1080 = vmatpush1.msra.mxu0 0.0
  %1081 = vmatprep.subr.mxu0 0.0
  %1082 = vmatpush1.msra.mxu0 0.0
  %1083 = vmatprep.subr.mxu0 0.0
  %1084 = vmatpush1.msra.mxu0 0.0
  %1085 = vmatprep.subr.mxu0 0.0
  %1086 = vmatpush1.msra.mxu0 0.0
  %1087 = vmatprep.subr.mxu0 0.0
  %1088 = vmatpush1.msra.mxu0 0.0
  %1089 = vmatprep.subr.mxu0 0.0
  %1090 = vmatpush1.msra.mxu0 0.0
  %1091 = vmatprep.subr.mxu0 0.0
  %1092 = vmatpush1.msra.mxu0 0.0
  %1093 = vmatprep.subr.mxu0 0.0
  %1094 = vmatpush1.msra.mxu0 0.0
  %1095 = vmatprep.subr.mxu0 0.0
  %1096 = vmatpush1.msra.mxu0 0.0
  %1097 = vmatprep.subr.mxu0 0.0
  %1098 = vmatpush1.msra.mxu0 0.0
  %1099 = vmatprep.subr.mxu0 0.0
  %1100 = vmatpush1.msra.mxu0 0.0
  %1101 = vmatprep.subr.mxu0 0.0
  %1102 = vmatpush1.msra.mxu0 0.0
  %1103 = vmatprep.subr.mxu0 0.0
  %1104 = vmatpush1.msra.mxu0 0.0
  %1105 = vmatprep.subr.mxu0 0.0
  %1106 = vmatpush1.msra.mxu0 0.0
  %1107 = vmatprep.subr.mxu0 0.0
  %1108 = vmatpush1.msra.mxu0 0.0
  %1109 = vmatprep.subr.mxu0 0.0
  %1110 = vmatpush1.msra.mxu0 0.0
  %1111 = vmatprep.subr.mxu0 0.0
  %1112 = vmatpush1.msra.mxu0 0.0
  %1113 = vmatprep.subr.mxu0 0.0
  %1114 = vmatpush1.msra.mxu0 0.0
  %1115 = vmatprep.subr.mxu0 0.0
  %1116 = vmatpush1.msra.mxu0 0.0
  %1117 = vmatprep.mubr.f32.mxu0 0.0
  %1118 = vmatmul.mubr.f32.gmra.mrb[0].mxu0 %v1051
  %v1119 = vpop.f32.mrb[0].mxu0
  %v1120 = vadd.f32 %v1049, %v1119
  %v1121 = vpop.f32.mrb[0].mxu0
  %1122 = vdwg.mxu0
  %v1123 = vtanh.pop %v1120
  %1124 = vst.msk [vmem:[%s9] sm:$0xff] %vm994, %v1123
  // Predicated region
  $region30: #{encoder_bert_forward.1} parent=0 // pred_check
    _
  $region31: #{encoder_bert_forward.1} parent=0 // pred_check_branch
    %1126 = sbr.rel (0) target = $region33
  $region32: #{encoder_bert_forward.1} parent=0 // pred_region
    _
  $region33: #{encoder_bert_forward.1} parent=0 // pred_fallthru
    _
  // Predicated region
  $region34: #{encoder_bert_forward.1} parent=0 // pred_check
    _
  $region35: #{encoder_bert_forward.1} parent=0 // pred_check_branch
    %1128 = sbr.rel (0) target = $region37
  $region36: #{encoder_bert_forward.1} parent=0 // pred_region
    _
  $region37: #{encoder_bert_forward.1} parent=0 // pred_fallthru
    _
  // Predicated region
  $region38: #{encoder_bert_forward.1} parent=0 // pred_check
    _
  $region39: #{encoder_bert_forward.1} parent=0 // pred_check_branch
    %1130 = sbr.rel (0) target = $region41
  $region40: #{encoder_bert_forward.1} parent=0 // pred_region
    _
  $region41: #{encoder_bert_forward.1} parent=0 // pred_fallthru
    _
  // Predicated region
  $region42: #{encoder_bert_forward.1} parent=0 // pred_check
    _
  $region43: #{encoder_bert_forward.1} parent=0 // pred_check_branch
    %1132 = sbr.rel (0) target = $region45
  $region44: #{encoder_bert_forward.1} parent=0 // pred_region
    _
  $region45: #{encoder_bert_forward.1} parent=0 // pred_fallthru
    _
  // Predicated region
  $region46: #{encoder_bert_forward.1} parent=0 // pred_check
    _
  $region47: #{encoder_bert_forward.1} parent=0 // pred_check_branch
    %1134 = sbr.rel (0) target = $region49
  $region48: #{encoder_bert_forward.1} parent=0 // pred_region
    _
  $region49: #{encoder_bert_forward.1} parent=0 // pred_fallthru
    _
  // Predicated region
  $region50: #{encoder_bert_forward.1} parent=0 // pred_check
    _
  $region51: #{encoder_bert_forward.1} parent=0 // pred_check_branch
    %1136 = sbr.rel (0) target = $region53
  $region52: #{encoder_bert_forward.1} parent=0 // pred_region
    _
  $region53: #{encoder_bert_forward.1} parent=0 // pred_fallthru
    _

</llo_original>
